<compile_context>
chip_gen: v7x
topology: tpu7x:2x2x1
jax: 0.10.0
libtpu: 0.0.40
codegen_flags: <defaults>
</compile_context>

<pallas_src>
import inspect

import jax
import jax.numpy as jnp
import numpy as np
from jax import lax
from jax.experimental import pallas as pl
from jax.experimental.pallas import tpu as pltpu


# ---------------------------------------------------------------------------
# Pallas kernel: one grid step == one (batch block b, time chunk c).
#
# Grid-order invariant (DO NOT change): the time-chunk axis must stay the
# innermost grid axis and must stay "arbitrary" — the h_state scratch carries
# the recurrence across time chunks and is only re-zeroed at c == 0, so all
# time chunks of a batch block must run in order on one core.
# ---------------------------------------------------------------------------
def _balrnn_kernel(x_ref, wih_ref, whh_ref, out_ref, hT_ref,
                   h_state, xw_vmem):
    # x_ref    : (Tc, Bc, I)   bf16  input chunk (time-major)
    # wih_ref  : (I, Hp)       bf16  W_ih[0]^T (padded), constant block index
    # whh_ref  : (L, Hp, Hp)   bf16  W_hh^T    (padded), constant block index
    # out_ref  : (Tc, Bc, Hp)  f32   per-timestep last-layer output
    # hT_ref   : (L, Bc, Hp)   f32   final hidden state; constant index over c
    #                                 (written on the last chunk, DMA'd out at
    #                                 batch-block change / grid end)
    # h_state  : (L, Bc, Hp)   f32   hidden-state carry across time chunks
    # xw_vmem  : (Tc, Bc, Hp)  f32   per-chunk feed-forward term
    c = pl.program_id(1)
    num_chunks = pl.num_programs(1)
    t_chunk = x_ref.shape[0]
    num_layers = whh_ref.shape[0]

    @pl.when(c == 0)
    def _():
        # Zero the hidden-state carry at the start of each batch block.
        h_state[...] = jnp.zeros_like(h_state)

    # Feed-forward term x_t @ W_ih[0]^T for the whole chunk, computed off the
    # recurrent critical path (tiny I contraction, MXU work only).
    def _ff_body(t, carry):
        xw_vmem[t] = jnp.dot(x_ref[t], wih_ref[...],
                             preferred_element_type=jnp.float32)
        return carry

    lax.fori_loop(0, t_chunk, _ff_body, 0,
                  unroll=t_chunk if t_chunk <= 8 else 4)

    # Sequential recurrence over the chunk (fori_loop with modest unroll keeps
    # vreg pressure / code size bounded for large Tc; layer loop is small and
    # Python-unrolled).
    def _step(t, h_prev):
        h_cur = []
        for layer in range(num_layers):
            if layer == 0:
                pre = xw_vmem[t] + jnp.dot(
                    h_prev[0].astype(jnp.bfloat16), whh_ref[0],
                    preferred_element_type=jnp.float32)
            else:
                # Both terms share W_hh[layer] -> fuse into a single matmul.
                s = (h_cur[layer - 1] + h_prev[layer]).astype(jnp.bfloat16)
                pre = jnp.dot(s, whh_ref[layer],
                              preferred_element_type=jnp.float32)
            h_cur.append(jnp.maximum(pre, 0.0))      # ReLU / carry stay f32
        out_ref[t] = h_cur[num_layers - 1]
        return tuple(h_cur)

    h0 = tuple(h_state[layer] for layer in range(num_layers))
    h_final = lax.fori_loop(0, t_chunk, _step, h0,
                            unroll=t_chunk if t_chunk <= 4 else 2)

    # Carry the hidden state to the next chunk (one scratch write per chunk).
    for layer in range(num_layers):
        h_state[layer] = h_final[layer]

    @pl.when(c == num_chunks - 1)
    def _():
        hT_ref[...] = h_state[...]


# ---------------------------------------------------------------------------
# Wrapper helpers.
# ---------------------------------------------------------------------------
def _largest_divisor_at_most(total, requested, allowed=None):
    requested = max(1, min(int(requested), total))
    for cand in range(requested, 0, -1):
        if total % cand == 0 and (allowed is None or allowed(cand)):
            return cand
    return total


def _tpu_vmem_capacity_bytes():
    try:
        return int(pltpu.get_tpu_info().vmem_capacity_bytes)
    except Exception:
        return 64 << 20          # conservative fallback: v7x per-TC VMEM


def _supports_pipeline_mode():
    if not hasattr(pl, "Buffered"):
        return False
    try:
        return "pipeline_mode" in inspect.signature(pl.BlockSpec).parameters
    except (TypeError, ValueError):
        return False


_HAS_PIPELINE_MODE = _supports_pipeline_mode()


def _resident_spec(block_shape, index_map):
    """Constant-indexed block (fetched once, never re-staged); single buffer
    when pipeline_mode is supported, to halve resident weight footprint."""
    if _HAS_PIPELINE_MODE:
        return pl.BlockSpec(block_shape, index_map,
                            pipeline_mode=pl.Buffered(1))
    return pl.BlockSpec(block_shape, index_map)


def _padded_bytes(shape, itemsize):
    sub = 8 * (4 // itemsize)                     # 8 f32 / 16 bf16 sublanes
    lane = -(-shape[-1] // 128) * 128
    second = -(-shape[-2] // sub) * sub
    lead = 1
    for d in shape[:-2]:
        lead *= d
    return lead * second * lane * itemsize


def _vmem_limit_bytes(t_chunk, b_chunk, hp, in_size, layers, capacity):
    est = 0
    est += 2 * _padded_bytes((t_chunk, b_chunk, in_size), 2)   # x (2 buffers)
    est += 2 * _padded_bytes((t_chunk, b_chunk, hp), 4)        # out (2 buffers)
    est += 2 * _padded_bytes((layers, b_chunk, hp), 4)         # hT block
    est += _padded_bytes((in_size, hp), 2)                     # W_ih0^T (1 buf)
    est += _padded_bytes((layers, hp, hp), 2)                  # W_hh^T  (1 buf)
    est += _padded_bytes((layers, b_chunk, hp), 4)             # h_state scratch
    est += _padded_bytes((t_chunk, b_chunk, hp), 4)            # xw scratch
    want = 2 * est + (4 << 20)                                 # headroom
    cap = max(16 << 20, int(capacity) - (16 << 20))            # leave margin
    return int(max(16 << 20, min(want, cap)))


# ---------------------------------------------------------------------------
# Wrapper: layout handling + pallas_call setup.
# ---------------------------------------------------------------------------
def balrnn_forward(x, w_ih, w_hh, *, num_layers, hidden_size, batch_first=True,
                   time_block=None, batch_block=None):
    """x: (B,T,I) if batch_first else (T,B,I). w_ih: (L,H,I). w_hh: (L,H,H).

    Returns (output, h_T), matching BalRNN.forward with h_0 = zeros.
    """
    # TODO(synk): optional h_0 initial state (reference defaults to zeros).
    L, H = num_layers, hidden_size
    if batch_first:
        B, T, I = x.shape
        x_tm = jnp.transpose(x, (1, 0, 2))
    else:
        T, B, I = x.shape
        x_tm = x
    # Stream x in bf16 (MXU-native operand; halves input HBM traffic).
    x_tm = x_tm.astype(jnp.bfloat16)

    # Pad the hidden dim to a multiple of 128 lanes.  Exact: padded weight
    # rows/cols are zero, so padded hidden units stay identically zero.
    Hp = -(-H // 128) * 128
    wih0_T = jnp.zeros((I, Hp), jnp.bfloat16)
    wih0_T = wih0_T.at[:, :H].set(jnp.transpose(w_ih[0]).astype(jnp.bfloat16))
    whh_T = jnp.zeros((L, Hp, Hp), jnp.bfloat16)
    whh_T = whh_T.at[:, :H, :H].set(
        jnp.transpose(w_hh, (0, 2, 1)).astype(jnp.bfloat16))

    vmem_cap = _tpu_vmem_capacity_bytes()
    if time_block is None:
        # Bigger chunks amortize per-grid-step pipeline overhead; v7x's 64 MiB
        # VMEM gets a smaller default than v5e/v6e's 128 MiB.
        time_block = 64 if vmem_cap >= (96 << 20) else 32
    if batch_block is None:
        # b_chunk is the MXU M dimension: target up to 256 rows.  On the
        # 64 MiB (2-TensorCore) generation leave >= 2 batch blocks so the
        # "parallel" grid axis can feed both cores.
        batch_block = min(B, 256)
        if vmem_cap < (96 << 20) and B >= 256:
            batch_block = min(batch_block, B // 2)

    t_chunk = _largest_divisor_at_most(T, time_block)
    b_chunk = _largest_divisor_at_most(
        B, batch_block,
        allowed=lambda d: d == B or d % 16 == 0)   # bf16 sublane packing
    grid = (B // b_chunk, T // t_chunk)            # (parallel batch, seq. time)

    out, h_T = pl.pallas_call(
        _balrnn_kernel,
        out_shape=(jax.ShapeDtypeStruct((T, B, Hp), jnp.float32),
                   jax.ShapeDtypeStruct((L, B, Hp), jnp.float32)),
        grid_spec=pltpu.PrefetchScalarGridSpec(
            num_scalar_prefetch=0,
            grid=grid,
            in_specs=[
                # Streamed input chunk (time-major).
                pl.BlockSpec((t_chunk, b_chunk, I), lambda b, c: (c, b, 0)),
                # Resident weights: constant block index -> fetched once per
                # core, never re-staged across batch blocks.
                _resident_spec((I, Hp), lambda b, c: (0, 0)),
                _resident_spec((L, Hp, Hp), lambda b, c: (0, 0, 0)),
            ],
            out_specs=[
                pl.BlockSpec((t_chunk, b_chunk, Hp), lambda b, c: (c, b, 0)),
                # Constant index over c: written in-kernel only on the last
                # chunk; DMA'd to HBM at batch-block change / grid end.
                pl.BlockSpec((L, b_chunk, Hp), lambda b, c: (0, b, 0)),
            ],
            scratch_shapes=[
                pltpu.VMEM((L, b_chunk, Hp), jnp.float32),        # h carry
                pltpu.VMEM((t_chunk, b_chunk, Hp), jnp.float32),  # xw chunk
            ],
        ),
        compiler_params=pltpu.CompilerParams(
            # Batch blocks independent (megacore-parallel on 2-TC parts);
            # the time-chunk axis is the sequential recurrence (see the
            # grid-order invariant in the kernel docstring).
            dimension_semantics=("parallel", "arbitrary"),
            vmem_limit_bytes=_vmem_limit_bytes(t_chunk, b_chunk, Hp, I, L,
                                               vmem_cap),
        ),
    )(x_tm, wih0_T, whh_T)

    out = out[..., :H]          # drop lane padding
    h_T = h_T[..., :H]
    if batch_first:
        out = jnp.transpose(out, (1, 0, 2))   # (T,B,H) -> (B,T,H)
    return out, h_T


# ---------------------------------------------------------------------------
# Deterministic parameter init (mirrors the sparse init structure densely).
# ---------------------------------------------------------------------------
def init_balrnn_params(key, input_size, hidden_size, num_layers,
                       K=10, JI0=0.4, JII=-0.1):
    sqK = int(K ** 0.5)
    keys = jax.random.split(key, 2 * num_layers)
    w_ih_list, w_hh_list = [], []
    for l in range(num_layers):
        m_ih = jax.random.bernoulli(keys[2 * l], K / input_size,
                                    (hidden_size, input_size))
        w_ih_list.append(
            jnp.where(m_ih, JI0 / jnp.sqrt(float(K)), 0.0).astype(jnp.float32))
        m_hh = jax.random.bernoulli(keys[2 * l + 1], K / hidden_size,
                                    (hidden_size, hidden_size))
        cum = jnp.cumsum(m_hh.astype(jnp.int32), axis=1)
        trainable = jnp.logical_and(m_hh, cum <= sqK)
        w = jnp.where(trainable, JII / jnp.sqrt(float(sqK)),
                      jnp.where(m_hh, JII / jnp.sqrt(float(K)), 0.0))
        w_hh_list.append(w.astype(jnp.float32))
    return jnp.stack(w_ih_list), jnp.stack(w_hh_list)


# ---------------------------------------------------------------------------
# Pure-JAX references.
# ---------------------------------------------------------------------------
def balrnn_ref_f32(x, w_ih, w_hh, num_layers, hidden_size):
    """Straight f32 port of the PyTorch forward (semantic ground truth)."""
    B, T, _ = x.shape
    xs = jnp.transpose(x, (1, 0, 2))
    h_prev = jnp.zeros((num_layers, B, hidden_size), jnp.float32)
    outs = []
    for t in range(T):
        h_cur = []
        for l in range(num_layers):
            if l == 0:
                pre = xs[t] @ w_ih[0].T + h_prev[0] @ w_hh[0].T
            else:
                pre = h_cur[l - 1] @ w_hh[l].T + h_prev[l] @ w_hh[l].T
            h_cur.append(jnp.maximum(pre, 0.0))
        h_cur = jnp.stack(h_cur)
        outs.append(h_cur[-1])
        h_prev = h_cur
    return jnp.transpose(jnp.stack(outs), (1, 0, 2)), h_prev


def balrnn_ref_bf16(x, w_ih, w_hh, num_layers, hidden_size):
    """Mirrors the kernel's math (bf16 operands, f32 accumulation, fused
    shared-weight matmul; zero-padding is exact) for a tight check."""
    bf = jnp.bfloat16
    B, T, _ = x.shape
    wih0 = w_ih[0].astype(bf)
    whhT = jnp.transpose(w_hh, (0, 2, 1)).astype(bf)
    xw = jnp.einsum("bti,hi->tbh", x.astype(bf), wih0,
                    preferred_element_type=jnp.float32)
    h_prev = [jnp.zeros((B, hidden_size), jnp.float32) for _ in range(num_layers)]
    outs = []
    for t in range(T):
        h_cur = []
        for l in range(num_layers):
            if l == 0:
                pre = xw[t] + jnp.dot(h_prev[0].astype(bf), whhT[0],
                                      preferred_element_type=jnp.float32)
            else:
                s = (h_cur[l - 1] + h_prev[l]).astype(bf)
                pre = jnp.dot(s, whhT[l], preferred_element_type=jnp.float32)
            h_cur.append(jnp.maximum(pre, 0.0))
        outs.append(h_cur[-1])
        h_prev = h_cur
    return jnp.transpose(jnp.stack(outs), (1, 0, 2)), jnp.stack(h_prev)


if __name__ == "__main__":
    batch, seq, input_size, hidden_size, num_layers = 2, 8, 16, 32, 2

    key = jax.random.PRNGKey(0)
    k_x, k_w, k_x2 = jax.random.split(key, 3)
    x = jax.random.normal(k_x, (batch, seq, input_size), dtype=jnp.float32)
    w_ih, w_hh = init_balrnn_params(k_w, input_size, hidden_size, num_layers)

    # Config 1: time_block=4 -> 2 time chunks (exercises cross-chunk carry).
    out, h_T = balrnn_forward(x, w_ih, w_hh,
                              num_layers=num_layers,
                              hidden_size=hidden_size,
                              batch_first=True,
                              time_block=4)
    jax.block_until_ready((out, h_T))

    # Tight check vs. a reference mirroring the kernel's bf16/f32 math.
    out_bf, hT_bf = balrnn_ref_bf16(x, w_ih, w_hh, num_layers, hidden_size)
    np.testing.assert_allclose(np.asarray(out), np.asarray(out_bf),
                               rtol=1e-4, atol=1e-5)
    np.testing.assert_allclose(np.asarray(h_T), np.asarray(hT_bf),
                               rtol=1e-4, atol=1e-5)

    # Looser check vs. the exact f32 PyTorch-semantics reference.
    out_f32, hT_f32 = balrnn_ref_f32(x, w_ih, w_hh, num_layers, hidden_size)
    np.testing.assert_allclose(np.asarray(out), np.asarray(out_f32),
                               rtol=5e-2, atol=2e-2)
    np.testing.assert_allclose(np.asarray(h_T), np.asarray(hT_f32),
                               rtol=5e-2, atol=2e-2)

    assert out.shape == (batch, seq, hidden_size)
    assert h_T.shape == (num_layers, batch, hidden_size)

    # Config 2: multiple batch blocks (parallel axis, 16-row MXU blocks) and
    # multiple time chunks driving the fori_loop recurrence path.
    B2, T2 = 32, 32
    x2 = jax.random.normal(k_x2, (B2, T2, input_size), dtype=jnp.float32)
    out2, hT2 = balrnn_forward(x2, w_ih, w_hh,
                               num_layers=num_layers,
                               hidden_size=hidden_size,
                               batch_first=True,
                               time_block=8, batch_block=16)
    jax.block_until_ready((out2, hT2))
    out2_bf, hT2_bf = balrnn_ref_bf16(x2, w_ih, w_hh, num_layers, hidden_size)
    np.testing.assert_allclose(np.asarray(out2), np.asarray(out2_bf),
                               rtol=1e-4, atol=1e-5)
    np.testing.assert_allclose(np.asarray(hT2), np.asarray(hT2_bf),
                               rtol=1e-4, atol=1e-5)
    assert out2.shape == (B2, T2, hidden_size)
    assert hT2.shape == (num_layers, B2, hidden_size)

    print("KERNEL_OK")
</pallas_src>

<mosaic_0001>
module attributes {stable_mosaic.version = 11 : i64} {
  func.func @_balrnn_kernel(%arg0: i32, %arg1: i32, %arg2: memref<4x2x16xbf16, #tpu.memory_space<vmem>>, %arg3: memref<16x128xbf16, #tpu.memory_space<vmem>>, %arg4: memref<2x128x128xbf16, #tpu.memory_space<vmem>>, %arg5: memref<4x2x128xf32, #tpu.memory_space<vmem>>, %arg6: memref<2x2x128xf32, #tpu.memory_space<vmem>>, %arg7: memref<2x2x128xf32, #tpu.memory_space<vmem>>, %arg8: memref<4x2x128xf32, #tpu.memory_space<vmem>>) attributes {dimension_semantics = [#tpu.dimension_semantics<parallel>, #tpu.dimension_semantics<arbitrary>], iteration_bounds = array<i64: 1, 2>, scalar_prefetch = 0 : i64, scratch_operands = 2 : i64, tpu.core_type = #tpu.core_type<tc>, window_params = [{transform_indices = @transform_0, window_bounds = array<i64: 4, 2, 16>}, {pipeline_mode = #tpu.pipeline_mode<synchronous>, transform_indices = @transform_1, window_bounds = array<i64: 16, 128>}, {pipeline_mode = #tpu.pipeline_mode<synchronous>, transform_indices = @transform_2, window_bounds = array<i64: 2, 128, 128>}, {transform_indices = @transform_3, window_bounds = array<i64: 4, 2, 128>}, {transform_indices = @transform_4, window_bounds = array<i64: 2, 2, 128>}]} {
    %c0_i32 = arith.constant 0 : i32
    %0 = arith.cmpi eq, %arg1, %c0_i32 : i32
    %1 = arith.extui %0 : i1 to i32
    %c0_i32_0 = arith.constant 0 : i32
    %2 = arith.cmpi ne, %1, %c0_i32_0 : i32
    scf.if %2 {
      %cst_102 = arith.constant 0.000000e+00 : f32
      %136 = vector.broadcast %cst_102 : f32 to vector<2x2x128xf32>
      %c0_103 = arith.constant 0 : index
      %c0_104 = arith.constant 0 : index
      %c0_105 = arith.constant 0 : index
      %137 = vector.load %arg7[%c0_103, %c0_104, %c0_105] : memref<2x2x128xf32, #tpu.memory_space<vmem>>, vector<2x2x128xf32>
      tpu.vector_store %arg7[%c0_103, %c0_104, %c0_105], %136 {strides = array<i32>} : memref<2x2x128xf32, #tpu.memory_space<vmem>>, vector<2x2x128xf32>,
    } else {
    }
    %c0_i32_1 = arith.constant 0 : i32
    %3 = arith.index_cast %c0_i32_1 : i32 to index
    %c0 = arith.constant 0 : index
    %c0_2 = arith.constant 0 : index
    %4 = vector.load %arg2[%3, %c0, %c0_2] : memref<4x2x16xbf16, #tpu.memory_space<vmem>>, vector<1x2x16xbf16>
    %5 = vector.shape_cast %4 : vector<1x2x16xbf16> to vector<2x16xbf16>
    %c0_3 = arith.constant 0 : index
    %c0_4 = arith.constant 0 : index
    %6 = vector.load %arg3[%c0_3, %c0_4] : memref<16x128xbf16, #tpu.memory_space<vmem>>, vector<16x128xbf16>
    %cst = arith.constant dense<0.000000e+00> : vector<2x128xf32>
    %7 = tpu.matmul %5, %6, %cst {dimension_numbers = #tpu.dot_dimension_numbers<[1], [0], [0], [1], [0, 0, 1, 1], [], []>} : vector<2x16xbf16>, vector<16x128xbf16>, vector<2x128xf32> -> vector<2x128xf32>
    %8 = arith.index_cast %c0_i32_1 : i32 to index
    %c0_5 = arith.constant 0 : index
    %c0_6 = arith.constant 0 : index
    %9 = vector.load %arg8[%8, %c0_5, %c0_6] : memref<4x2x128xf32, #tpu.memory_space<vmem>>, vector<1x2x128xf32>
    %10 = vector.shape_cast %9 : vector<1x2x128xf32> to vector<2x128xf32>
    %11 = vector.shape_cast %7 : vector<2x128xf32> to vector<1x2x128xf32>
    tpu.vector_store %arg8[%8, %c0_5, %c0_6], %11 {strides = array<i32>} : memref<4x2x128xf32, #tpu.memory_space<vmem>>, vector<1x2x128xf32>,
    %c1_i32 = arith.constant 1 : i32
    %12 = arith.index_cast %c1_i32 : i32 to index
    %c0_7 = arith.constant 0 : index
    %c0_8 = arith.constant 0 : index
    %13 = vector.load %arg2[%12, %c0_7, %c0_8] : memref<4x2x16xbf16, #tpu.memory_space<vmem>>, vector<1x2x16xbf16>
    %14 = vector.shape_cast %13 : vector<1x2x16xbf16> to vector<2x16xbf16>
    %c0_9 = arith.constant 0 : index
    %c0_10 = arith.constant 0 : index
    %15 = vector.load %arg3[%c0_9, %c0_10] : memref<16x128xbf16, #tpu.memory_space<vmem>>, vector<16x128xbf16>
    %cst_11 = arith.constant dense<0.000000e+00> : vector<2x128xf32>
    %16 = tpu.matmul %14, %15, %cst_11 {dimension_numbers = #tpu.dot_dimension_numbers<[1], [0], [0], [1], [0, 0, 1, 1], [], []>} : vector<2x16xbf16>, vector<16x128xbf16>, vector<2x128xf32> -> vector<2x128xf32>
    %17 = arith.index_cast %c1_i32 : i32 to index
    %c0_12 = arith.constant 0 : index
    %c0_13 = arith.constant 0 : index
    %18 = vector.load %arg8[%17, %c0_12, %c0_13] : memref<4x2x128xf32, #tpu.memory_space<vmem>>, vector<1x2x128xf32>
    %19 = vector.shape_cast %18 : vector<1x2x128xf32> to vector<2x128xf32>
    %20 = vector.shape_cast %16 : vector<2x128xf32> to vector<1x2x128xf32>
    tpu.vector_store %arg8[%17, %c0_12, %c0_13], %20 {strides = array<i32>} : memref<4x2x128xf32, #tpu.memory_space<vmem>>, vector<1x2x128xf32>,
    %c2_i32 = arith.constant 2 : i32
    %21 = arith.index_cast %c2_i32 : i32 to index
    %c0_14 = arith.constant 0 : index
    %c0_15 = arith.constant 0 : index
    %22 = vector.load %arg2[%21, %c0_14, %c0_15] : memref<4x2x16xbf16, #tpu.memory_space<vmem>>, vector<1x2x16xbf16>
    %23 = vector.shape_cast %22 : vector<1x2x16xbf16> to vector<2x16xbf16>
    %c0_16 = arith.constant 0 : index
    %c0_17 = arith.constant 0 : index
    %24 = vector.load %arg3[%c0_16, %c0_17] : memref<16x128xbf16, #tpu.memory_space<vmem>>, vector<16x128xbf16>
    %cst_18 = arith.constant dense<0.000000e+00> : vector<2x128xf32>
    %25 = tpu.matmul %23, %24, %cst_18 {dimension_numbers = #tpu.dot_dimension_numbers<[1], [0], [0], [1], [0, 0, 1, 1], [], []>} : vector<2x16xbf16>, vector<16x128xbf16>, vector<2x128xf32> -> vector<2x128xf32>
    %26 = arith.index_cast %c2_i32 : i32 to index
    %c0_19 = arith.constant 0 : index
    %c0_20 = arith.constant 0 : index
    %27 = vector.load %arg8[%26, %c0_19, %c0_20] : memref<4x2x128xf32, #tpu.memory_space<vmem>>, vector<1x2x128xf32>
    %28 = vector.shape_cast %27 : vector<1x2x128xf32> to vector<2x128xf32>
    %29 = vector.shape_cast %25 : vector<2x128xf32> to vector<1x2x128xf32>
    tpu.vector_store %arg8[%26, %c0_19, %c0_20], %29 {strides = array<i32>} : memref<4x2x128xf32, #tpu.memory_space<vmem>>, vector<1x2x128xf32>,
    %c3_i32 = arith.constant 3 : i32
    %30 = arith.index_cast %c3_i32 : i32 to index
    %c0_21 = arith.constant 0 : index
    %c0_22 = arith.constant 0 : index
    %31 = vector.load %arg2[%30, %c0_21, %c0_22] : memref<4x2x16xbf16, #tpu.memory_space<vmem>>, vector<1x2x16xbf16>
    %32 = vector.shape_cast %31 : vector<1x2x16xbf16> to vector<2x16xbf16>
    %c0_23 = arith.constant 0 : index
    %c0_24 = arith.constant 0 : index
    %33 = vector.load %arg3[%c0_23, %c0_24] : memref<16x128xbf16, #tpu.memory_space<vmem>>, vector<16x128xbf16>
    %cst_25 = arith.constant dense<0.000000e+00> : vector<2x128xf32>
    %34 = tpu.matmul %32, %33, %cst_25 {dimension_numbers = #tpu.dot_dimension_numbers<[1], [0], [0], [1], [0, 0, 1, 1], [], []>} : vector<2x16xbf16>, vector<16x128xbf16>, vector<2x128xf32> -> vector<2x128xf32>
    %35 = arith.index_cast %c3_i32 : i32 to index
    %c0_26 = arith.constant 0 : index
    %c0_27 = arith.constant 0 : index
    %36 = vector.load %arg8[%35, %c0_26, %c0_27] : memref<4x2x128xf32, #tpu.memory_space<vmem>>, vector<1x2x128xf32>
    %37 = vector.shape_cast %36 : vector<1x2x128xf32> to vector<2x128xf32>
    %38 = vector.shape_cast %34 : vector<2x128xf32> to vector<1x2x128xf32>
    tpu.vector_store %arg8[%35, %c0_26, %c0_27], %38 {strides = array<i32>} : memref<4x2x128xf32, #tpu.memory_space<vmem>>, vector<1x2x128xf32>,
    %c4_i32 = arith.constant 4 : i32
    %c0_28 = arith.constant 0 : index
    %c0_29 = arith.constant 0 : index
    %c0_30 = arith.constant 0 : index
    %39 = vector.load %arg7[%c0_28, %c0_29, %c0_30] : memref<2x2x128xf32, #tpu.memory_space<vmem>>, vector<1x2x128xf32>
    %40 = vector.shape_cast %39 : vector<1x2x128xf32> to vector<2x128xf32>
    %c1 = arith.constant 1 : index
    %c0_31 = arith.constant 0 : index
    %c0_32 = arith.constant 0 : index
    %41 = vector.load %arg7[%c1, %c0_31, %c0_32] : memref<2x2x128xf32, #tpu.memory_space<vmem>>, vector<1x2x128xf32>
    %42 = vector.shape_cast %41 : vector<1x2x128xf32> to vector<2x128xf32>
    %c0_i32_33 = arith.constant 0 : i32
    %43 = arith.index_cast %c0_i32_33 : i32 to index
    %c0_34 = arith.constant 0 : index
    %c0_35 = arith.constant 0 : index
    %44 = vector.load %arg8[%43, %c0_34, %c0_35] : memref<4x2x128xf32, #tpu.memory_space<vmem>>, vector<1x2x128xf32>
    %45 = vector.shape_cast %44 : vector<1x2x128xf32> to vector<2x128xf32>
    %46 = arith.truncf %40 : vector<2x128xf32> to vector<2x128xbf16>
    %c0_36 = arith.constant 0 : index
    %c0_37 = arith.constant 0 : index
    %c0_38 = arith.constant 0 : index
    %47 = vector.load %arg4[%c0_36, %c0_37, %c0_38] : memref<2x128x128xbf16, #tpu.memory_space<vmem>>, vector<1x128x128xbf16>
    %48 = vector.shape_cast %47 : vector<1x128x128xbf16> to vector<128x128xbf16>
    %cst_39 = arith.constant dense<0.000000e+00> : vector<2x128xf32>
    %49 = tpu.matmul %46, %48, %cst_39 {dimension_numbers = #tpu.dot_dimension_numbers<[1], [0], [0], [1], [0, 0, 1, 1], [], []>} : vector<2x128xbf16>, vector<128x128xbf16>, vector<2x128xf32> -> vector<2x128xf32>
    %50 = arith.addf %45, %49 : vector<2x128xf32>
    %cst_40 = arith.constant 0.000000e+00 : f32
    %51 = vector.broadcast %cst_40 : f32 to vector<2x128xf32>
    %52 = arith.maximumf %50, %51 : vector<2x128xf32>
    %53 = arith.addf %52, %42 : vector<2x128xf32>
    %54 = arith.truncf %53 : vector<2x128xf32> to vector<2x128xbf16>
    %c1_41 = arith.constant 1 : index
    %c0_42 = arith.constant 0 : index
    %c0_43 = arith.constant 0 : index
    %55 = vector.load %arg4[%c1_41, %c0_42, %c0_43] : memref<2x128x128xbf16, #tpu.memory_space<vmem>>, vector<1x128x128xbf16>
    %56 = vector.shape_cast %55 : vector<1x128x128xbf16> to vector<128x128xbf16>
    %cst_44 = arith.constant dense<0.000000e+00> : vector<2x128xf32>
    %57 = tpu.matmul %54, %56, %cst_44 {dimension_numbers = #tpu.dot_dimension_numbers<[1], [0], [0], [1], [0, 0, 1, 1], [], []>} : vector<2x128xbf16>, vector<128x128xbf16>, vector<2x128xf32> -> vector<2x128xf32>
    %cst_45 = arith.constant 0.000000e+00 : f32
    %58 = vector.broadcast %cst_45 : f32 to vector<2x128xf32>
    %59 = arith.maximumf %57, %58 : vector<2x128xf32>
    %60 = arith.index_cast %c0_i32_33 : i32 to index
    %c0_46 = arith.constant 0 : index
    %c0_47 = arith.constant 0 : index
    %61 = vector.load %arg5[%60, %c0_46, %c0_47] : memref<4x2x128xf32, #tpu.memory_space<vmem>>, vector<1x2x128xf32>
    %62 = vector.shape_cast %61 : vector<1x2x128xf32> to vector<2x128xf32>
    %63 = vector.shape_cast %59 : vector<2x128xf32> to vector<1x2x128xf32>
    tpu.vector_store %arg5[%60, %c0_46, %c0_47], %63 {strides = array<i32>} : memref<4x2x128xf32, #tpu.memory_space<vmem>>, vector<1x2x128xf32>,
    %c1_i32_48 = arith.constant 1 : i32
    %64 = arith.index_cast %c1_i32_48 : i32 to index
    %c0_49 = arith.constant 0 : index
    %c0_50 = arith.constant 0 : index
    %65 = vector.load %arg8[%64, %c0_49, %c0_50] : memref<4x2x128xf32, #tpu.memory_space<vmem>>, vector<1x2x128xf32>
    %66 = vector.shape_cast %65 : vector<1x2x128xf32> to vector<2x128xf32>
    %67 = arith.truncf %52 : vector<2x128xf32> to vector<2x128xbf16>
    %c0_51 = arith.constant 0 : index
    %c0_52 = arith.constant 0 : index
    %c0_53 = arith.constant 0 : index
    %68 = vector.load %arg4[%c0_51, %c0_52, %c0_53] : memref<2x128x128xbf16, #tpu.memory_space<vmem>>, vector<1x128x128xbf16>
    %69 = vector.shape_cast %68 : vector<1x128x128xbf16> to vector<128x128xbf16>
    %cst_54 = arith.constant dense<0.000000e+00> : vector<2x128xf32>
    %70 = tpu.matmul %67, %69, %cst_54 {dimension_numbers = #tpu.dot_dimension_numbers<[1], [0], [0], [1], [0, 0, 1, 1], [], []>} : vector<2x128xbf16>, vector<128x128xbf16>, vector<2x128xf32> -> vector<2x128xf32>
    %71 = arith.addf %66, %70 : vector<2x128xf32>
    %cst_55 = arith.constant 0.000000e+00 : f32
    %72 = vector.broadcast %cst_55 : f32 to vector<2x128xf32>
    %73 = arith.maximumf %71, %72 : vector<2x128xf32>
    %74 = arith.addf %73, %59 : vector<2x128xf32>
    %75 = arith.truncf %74 : vector<2x128xf32> to vector<2x128xbf16>
    %c1_56 = arith.constant 1 : index
    %c0_57 = arith.constant 0 : index
    %c0_58 = arith.constant 0 : index
    %76 = vector.load %arg4[%c1_56, %c0_57, %c0_58] : memref<2x128x128xbf16, #tpu.memory_space<vmem>>, vector<1x128x128xbf16>
    %77 = vector.shape_cast %76 : vector<1x128x128xbf16> to vector<128x128xbf16>
    %cst_59 = arith.constant dense<0.000000e+00> : vector<2x128xf32>
    %78 = tpu.matmul %75, %77, %cst_59 {dimension_numbers = #tpu.dot_dimension_numbers<[1], [0], [0], [1], [0, 0, 1, 1], [], []>} : vector<2x128xbf16>, vector<128x128xbf16>, vector<2x128xf32> -> vector<2x128xf32>
    %cst_60 = arith.constant 0.000000e+00 : f32
    %79 = vector.broadcast %cst_60 : f32 to vector<2x128xf32>
    %80 = arith.maximumf %78, %79 : vector<2x128xf32>
    %81 = arith.index_cast %c1_i32_48 : i32 to index
    %c0_61 = arith.constant 0 : index
    %c0_62 = arith.constant 0 : index
    %82 = vector.load %arg5[%81, %c0_61, %c0_62] : memref<4x2x128xf32, #tpu.memory_space<vmem>>, vector<1x2x128xf32>
    %83 = vector.shape_cast %82 : vector<1x2x128xf32> to vector<2x128xf32>
    %84 = vector.shape_cast %80 : vector<2x128xf32> to vector<1x2x128xf32>
    tpu.vector_store %arg5[%81, %c0_61, %c0_62], %84 {strides = array<i32>} : memref<4x2x128xf32, #tpu.memory_space<vmem>>, vector<1x2x128xf32>,
    %c2_i32_63 = arith.constant 2 : i32
    %85 = arith.index_cast %c2_i32_63 : i32 to index
    %c0_64 = arith.constant 0 : index
    %c0_65 = arith.constant 0 : index
    %86 = vector.load %arg8[%85, %c0_64, %c0_65] : memref<4x2x128xf32, #tpu.memory_space<vmem>>, vector<1x2x128xf32>
    %87 = vector.shape_cast %86 : vector<1x2x128xf32> to vector<2x128xf32>
    %88 = arith.truncf %73 : vector<2x128xf32> to vector<2x128xbf16>
    %c0_66 = arith.constant 0 : index
    %c0_67 = arith.constant 0 : index
    %c0_68 = arith.constant 0 : index
    %89 = vector.load %arg4[%c0_66, %c0_67, %c0_68] : memref<2x128x128xbf16, #tpu.memory_space<vmem>>, vector<1x128x128xbf16>
    %90 = vector.shape_cast %89 : vector<1x128x128xbf16> to vector<128x128xbf16>
    %cst_69 = arith.constant dense<0.000000e+00> : vector<2x128xf32>
    %91 = tpu.matmul %88, %90, %cst_69 {dimension_numbers = #tpu.dot_dimension_numbers<[1], [0], [0], [1], [0, 0, 1, 1], [], []>} : vector<2x128xbf16>, vector<128x128xbf16>, vector<2x128xf32> -> vector<2x128xf32>
    %92 = arith.addf %87, %91 : vector<2x128xf32>
    %cst_70 = arith.constant 0.000000e+00 : f32
    %93 = vector.broadcast %cst_70 : f32 to vector<2x128xf32>
    %94 = arith.maximumf %92, %93 : vector<2x128xf32>
    %95 = arith.addf %94, %80 : vector<2x128xf32>
    %96 = arith.truncf %95 : vector<2x128xf32> to vector<2x128xbf16>
    %c1_71 = arith.constant 1 : index
    %c0_72 = arith.constant 0 : index
    %c0_73 = arith.constant 0 : index
    %97 = vector.load %arg4[%c1_71, %c0_72, %c0_73] : memref<2x128x128xbf16, #tpu.memory_space<vmem>>, vector<1x128x128xbf16>
    %98 = vector.shape_cast %97 : vector<1x128x128xbf16> to vector<128x128xbf16>
    %cst_74 = arith.constant dense<0.000000e+00> : vector<2x128xf32>
    %99 = tpu.matmul %96, %98, %cst_74 {dimension_numbers = #tpu.dot_dimension_numbers<[1], [0], [0], [1], [0, 0, 1, 1], [], []>} : vector<2x128xbf16>, vector<128x128xbf16>, vector<2x128xf32> -> vector<2x128xf32>
    %cst_75 = arith.constant 0.000000e+00 : f32
    %100 = vector.broadcast %cst_75 : f32 to vector<2x128xf32>
    %101 = arith.maximumf %99, %100 : vector<2x128xf32>
    %102 = arith.index_cast %c2_i32_63 : i32 to index
    %c0_76 = arith.constant 0 : index
    %c0_77 = arith.constant 0 : index
    %103 = vector.load %arg5[%102, %c0_76, %c0_77] : memref<4x2x128xf32, #tpu.memory_space<vmem>>, vector<1x2x128xf32>
    %104 = vector.shape_cast %103 : vector<1x2x128xf32> to vector<2x128xf32>
    %105 = vector.shape_cast %101 : vector<2x128xf32> to vector<1x2x128xf32>
    tpu.vector_store %arg5[%102, %c0_76, %c0_77], %105 {strides = array<i32>} : memref<4x2x128xf32, #tpu.memory_space<vmem>>, vector<1x2x128xf32>,
    %c3_i32_78 = arith.constant 3 : i32
    %106 = arith.index_cast %c3_i32_78 : i32 to index
    %c0_79 = arith.constant 0 : index
    %c0_80 = arith.constant 0 : index
    %107 = vector.load %arg8[%106, %c0_79, %c0_80] : memref<4x2x128xf32, #tpu.memory_space<vmem>>, vector<1x2x128xf32>
    %108 = vector.shape_cast %107 : vector<1x2x128xf32> to vector<2x128xf32>
    %109 = arith.truncf %94 : vector<2x128xf32> to vector<2x128xbf16>
    %c0_81 = arith.constant 0 : index
    %c0_82 = arith.constant 0 : index
    %c0_83 = arith.constant 0 : index
    %110 = vector.load %arg4[%c0_81, %c0_82, %c0_83] : memref<2x128x128xbf16, #tpu.memory_space<vmem>>, vector<1x128x128xbf16>
    %111 = vector.shape_cast %110 : vector<1x128x128xbf16> to vector<128x128xbf16>
    %cst_84 = arith.constant dense<0.000000e+00> : vector<2x128xf32>
    %112 = tpu.matmul %109, %111, %cst_84 {dimension_numbers = #tpu.dot_dimension_numbers<[1], [0], [0], [1], [0, 0, 1, 1], [], []>} : vector<2x128xbf16>, vector<128x128xbf16>, vector<2x128xf32> -> vector<2x128xf32>
    %113 = arith.addf %108, %112 : vector<2x128xf32>
    %cst_85 = arith.constant 0.000000e+00 : f32
    %114 = vector.broadcast %cst_85 : f32 to vector<2x128xf32>
    %115 = arith.maximumf %113, %114 : vector<2x128xf32>
    %116 = arith.addf %115, %101 : vector<2x128xf32>
    %117 = arith.truncf %116 : vector<2x128xf32> to vector<2x128xbf16>
    %c1_86 = arith.constant 1 : index
    %c0_87 = arith.constant 0 : index
    %c0_88 = arith.constant 0 : index
    %118 = vector.load %arg4[%c1_86, %c0_87, %c0_88] : memref<2x128x128xbf16, #tpu.memory_space<vmem>>, vector<1x128x128xbf16>
    %119 = vector.shape_cast %118 : vector<1x128x128xbf16> to vector<128x128xbf16>
    %cst_89 = arith.constant dense<0.000000e+00> : vector<2x128xf32>
    %120 = tpu.matmul %117, %119, %cst_89 {dimension_numbers = #tpu.dot_dimension_numbers<[1], [0], [0], [1], [0, 0, 1, 1], [], []>} : vector<2x128xbf16>, vector<128x128xbf16>, vector<2x128xf32> -> vector<2x128xf32>
    %cst_90 = arith.constant 0.000000e+00 : f32
    %121 = vector.broadcast %cst_90 : f32 to vector<2x128xf32>
    %122 = arith.maximumf %120, %121 : vector<2x128xf32>
    %123 = arith.index_cast %c3_i32_78 : i32 to index
    %c0_91 = arith.constant 0 : index
    %c0_92 = arith.constant 0 : index
    %124 = vector.load %arg5[%123, %c0_91, %c0_92] : memref<4x2x128xf32, #tpu.memory_space<vmem>>, vector<1x2x128xf32>
    %125 = vector.shape_cast %124 : vector<1x2x128xf32> to vector<2x128xf32>
    %126 = vector.shape_cast %122 : vector<2x128xf32> to vector<1x2x128xf32>
    tpu.vector_store %arg5[%123, %c0_91, %c0_92], %126 {strides = array<i32>} : memref<4x2x128xf32, #tpu.memory_space<vmem>>, vector<1x2x128xf32>,
    %c4_i32_93 = arith.constant 4 : i32
    %c0_94 = arith.constant 0 : index
    %c0_95 = arith.constant 0 : index
    %c0_96 = arith.constant 0 : index
    %127 = vector.load %arg7[%c0_94, %c0_95, %c0_96] : memref<2x2x128xf32, #tpu.memory_space<vmem>>, vector<1x2x128xf32>
    %128 = vector.shape_cast %127 : vector<1x2x128xf32> to vector<2x128xf32>
    %129 = vector.shape_cast %115 : vector<2x128xf32> to vector<1x2x128xf32>
    tpu.vector_store %arg7[%c0_94, %c0_95, %c0_96], %129 {strides = array<i32>} : memref<2x2x128xf32, #tpu.memory_space<vmem>>, vector<1x2x128xf32>,
    %c1_97 = arith.constant 1 : index
    %c0_98 = arith.constant 0 : index
    %c0_99 = arith.constant 0 : index
    %130 = vector.load %arg7[%c1_97, %c0_98, %c0_99] : memref<2x2x128xf32, #tpu.memory_space<vmem>>, vector<1x2x128xf32>
    %131 = vector.shape_cast %130 : vector<1x2x128xf32> to vector<2x128xf32>
    %132 = vector.shape_cast %122 : vector<2x128xf32> to vector<1x2x128xf32>
    tpu.vector_store %arg7[%c1_97, %c0_98, %c0_99], %132 {strides = array<i32>} : memref<2x2x128xf32, #tpu.memory_space<vmem>>, vector<1x2x128xf32>,
    %c1_i32_100 = arith.constant 1 : i32
    %133 = arith.cmpi eq, %arg1, %c1_i32_100 : i32
    %134 = arith.extui %133 : i1 to i32
    %c0_i32_101 = arith.constant 0 : i32
    %135 = arith.cmpi ne, %134, %c0_i32_101 : i32
    scf.if %135 {
      %c0_102 = arith.constant 0 : index
      %c0_103 = arith.constant 0 : index
      %c0_104 = arith.constant 0 : index
      %136 = vector.load %arg7[%c0_102, %c0_103, %c0_104] : memref<2x2x128xf32, #tpu.memory_space<vmem>>, vector<2x2x128xf32>
      %c0_105 = arith.constant 0 : index
      %c0_106 = arith.constant 0 : index
      %c0_107 = arith.constant 0 : index
      %137 = vector.load %arg6[%c0_105, %c0_106, %c0_107] : memref<2x2x128xf32, #tpu.memory_space<vmem>>, vector<2x2x128xf32>
      tpu.vector_store %arg6[%c0_105, %c0_106, %c0_107], %136 {strides = array<i32>} : memref<2x2x128xf32, #tpu.memory_space<vmem>>, vector<2x2x128xf32>,
    } else {
    }
    return
  }
  func.func @transform_0(%arg0: i32, %arg1: i32) -> (i32, i32, i32) {
    %c0_i32 = arith.constant 0 : i32
    %c0_i32_0 = arith.constant 0 : i32
    return %arg1, %arg0, %c0_i32 : i32, i32, i32
  }
  func.func @transform_1(%arg0: i32, %arg1: i32) -> (i32, i32) {
    %c0_i32 = arith.constant 0 : i32
    %c0_i32_0 = arith.constant 0 : i32
    %c0_i32_1 = arith.constant 0 : i32
    return %c0_i32, %c0_i32_0 : i32, i32
  }
  func.func @transform_2(%arg0: i32, %arg1: i32) -> (i32, i32, i32) {
    %c0_i32 = arith.constant 0 : i32
    %c0_i32_0 = arith.constant 0 : i32
    %c0_i32_1 = arith.constant 0 : i32
    %c0_i32_2 = arith.constant 0 : i32
    return %c0_i32, %c0_i32_0, %c0_i32_1 : i32, i32, i32
  }
  func.func @transform_3(%arg0: i32, %arg1: i32) -> (i32, i32, i32) {
    %c0_i32 = arith.constant 0 : i32
    %c0_i32_0 = arith.constant 0 : i32
    return %arg1, %arg0, %c0_i32 : i32, i32, i32
  }
  func.func @transform_4(%arg0: i32, %arg1: i32) -> (i32, i32, i32) {
    %c0_i32 = arith.constant 0 : i32
    %c0_i32_0 = arith.constant 0 : i32
    %c0_i32_1 = arith.constant 0 : i32
    return %c0_i32, %arg0, %c0_i32_0 : i32, i32, i32
  }
}

</mosaic_0001>

<llo_original>
// kernel: tpu_custom_call.1
$region0: #{tpu_custom_call.1}
  #allocation0 [shape = 'u32[]', space=smem, size = 0x4, offset = 0x4, fixed_abs, tag = 'smem constant byte address 0x4 - core index']
  #allocation1 [shape = 'u32[144,128]{1,0:T(1,128)}', space=vmem, size = 0x12000, scoped, tag = 'internal scratch']
  #allocation2 [shape = 'f32[2,2,128]{2,1,0:T(2,128)}', space=vmem, size = 0x800, scoped, tag = 'scratch operand']
  #allocation3 [shape = 'f32[4,2,128]{2,1,0:T(2,128)}', space=vmem, size = 0x1000, scoped, tag = 'scratch operand']
  %s0 = inlined_call_operand.hbm [shape: bf16[8,2,16], index: 0, kind: input, shape index: {}]
  %s1 = inlined_call_operand.hbm [shape: bf16[16,128], index: 1, kind: input, shape index: {}]
  %s2 = inlined_call_operand.hbm [shape: bf16[2,128,128], index: 2, kind: input, shape index: {}]
  %s3 = inlined_call_operand.hbm [shape: f32[8,2,128], index: 3, kind: output, shape index: {0}]
  %s4 = inlined_call_operand.hbm [shape: f32[2,2,128], index: 4, kind: output, shape index: {1}]
  %5 = xla_tuple %s3, %s4
  %s6 = sld [smem:[#allocation0]]
  $region73: #{tpu_custom_call.1} parent=0
    _
  %s8 = ssub.s32 1, %s6
  %s9 = scalar_select 0, %s8, %s6
  $region1: #{tpu_custom_call.1} parent=0
    #allocation4 [shape = 'u8[4096]{0}', space=vmem, size = 0x1000, scoped, tag = 'input window, operand 0']
    #allocation5 [shape = 's32[2]{0}', space=sflag, size = 0x8, scoped, tag = 'scoped memory for tpu_custom_call.1']
    #allocation6 [shape = 's32[2]{0}', space=sflag, size = 0x8, scoped, tag = 'scoped memory for tpu_custom_call.1']
    #allocation7 [shape = 'u8[4096]{0}', space=vmem, size = 0x1000, scoped, tag = 'input window, operand 1, single buffered']
    #allocation8 [shape = 's32[1]{0}', space=sflag, size = 0x4, scoped, tag = 'scoped memory for tpu_custom_call.1']
    #allocation9 [shape = 'u8[65536]{0}', space=vmem, size = 0x10000, scoped, tag = 'input window, operand 2, single buffered']
    #allocation10 [shape = 'u8[8192]{0}', space=vmem, size = 0x2000, scoped, tag = 'output window, operand 0']
    #allocation11 [shape = 'u8[2048]{0}', space=vmem, size = 0x800, scoped, tag = 'output window, operand 1, single buffered']
    #allocation12 [shape = 's32[1]{0}', space=sflag, size = 0x4, scoped, tag = 'scoped memory for tpu_custom_call.1']
    %10 = vsyncpa [#allocation5], 0
    %s11 = scalar_lea.sflag [#allocation5], 1
    %12 = vsyncpa %s11, 0
    %13 = vsyncpa [#allocation8], 0
    %14 = vsyncpa [#allocation6], 0
    %s15 = scalar_lea.sflag [#allocation6], 1
    %16 = vsyncpa %s15, 0
    %17 = vsyncpa [#allocation12], 0
    loop: start=0, step=1, limit=4
    $region2: #{tpu_custom_call.1} parent=1 // loop_pre_header
      _
    $region3: #{tpu_custom_call.1} parent=1 // loop_header
      %s19 = sphi 0, %s23
      %p20 = scmp.ge.s32.totalorder %s19, 4
      %s26 = sphi 0, %s38
      %s27 = sphi 0, %s34
      %s28 = sphi 0, %s26
      %s29 = sphi 0, %s27
      %s30 = sphi 0, %s28
      %s31 = sphi 0, %s29
      %s43 = sphi 0, %s45
      %s46 = sphi 0, %s43
      %s47 = sphi 0, %s46
      %s63 = sphi 0, %s47
      %s67 = sphi 0, %s67
      %s69 = sphi 0, %s67
      %s70 = sphi 0, %s69
      %s84 = sphi 0, %s70
      %s88 = sphi 0, %s88
      %s90 = sphi 0, %s88
      %s91 = sphi 0, %s90
      %s105 = sphi 0, %s91
      %s113 = sphi 0, %s115
      %s116 = sphi 0, %s113
      %s117 = sphi 0, %s116
      %s133 = sphi 0, %s117
      %s139 = sphi 0, %s141
      %s142 = sphi 0, %s139
      %s143 = sphi 0, %s142
      %s159 = sphi 0, %s143
    $region4: #{tpu_custom_call.1} parent=1 // loop_header_branch
      %22 = sbr.rel (%p20) target = $region8
    $region5: #{tpu_custom_call.1} parent=1 // loop_body
      %s24 = ssub.s32 %s19, 1
      %s25 = ssub.s32 %s19, 2
      %s32 = sadd.s32 1, %s27
      %p33 = scmp.ge.s32.totalorder %s32, 2
      %s34 = scalar_select %p33, 0, %s32
      %s35 = sadd.s32 1, %s26
      %s36 = scalar_select %p33, %s35, %s26
      %p37 = scmp.ge.s32.totalorder %s36, 1
      %s38 = scalar_select %p37, 0, %s36
      %s39 = ssub.s32 %s27, %s34
      %s40 = ssub.s32 %s26, %s38
      %s41 = sor.u32 %s39, %s40
      %p42 = scmp.eq.s32.totalorder %s41, 0
      %s44 = sadd.s32 %s43, 1
      %s45 = scalar_select %p42, %s43, %s44
      %p48 = pneg %p42
      %p49 = scmp.eq.s32.totalorder %s19, 1
      %p50 = por %p48, %p49
      %p51 = scmp.ne.s32.totalorder %s43, %s46
      %p52 = scmp.eq.s32.totalorder %s19, 0
      %p53 = por %p51, %p52
      %p54 = scmp.ne.s32.totalorder %s43, %s46
      %p55 = scmp.eq.s32.totalorder %s24, 1
      %p56 = por %p54, %p55
      %p57 = scmp.ne.s32.totalorder %s46, %s47
      %p58 = scmp.eq.s32.totalorder %s24, 0
      %p59 = por %p57, %p58
      %p60 = scmp.ne.s32.totalorder %s46, %s47
      %p61 = scmp.eq.s32.totalorder %s25, 1
      %p62 = por %p60, %p61
      %p64 = scmp.ne.s32.totalorder %s47, %s63
      %p65 = scmp.eq.s32.totalorder %s25, 0
      %p66 = por %p64, %p65
      %s68 = sadd.s32 %s67, 1
      %p71 = scmp.eq.s32.totalorder %s19, 1
      %p72 = scmp.ne.s32.totalorder %s67, %s69
      %p73 = scmp.eq.s32.totalorder %s19, 0
      %p74 = por %p72, %p73
      %p75 = scmp.ne.s32.totalorder %s67, %s69
      %p76 = scmp.eq.s32.totalorder %s24, 1
      %p77 = por %p75, %p76
      %p78 = scmp.ne.s32.totalorder %s69, %s70
      %p79 = scmp.eq.s32.totalorder %s24, 0
      %p80 = por %p78, %p79
      %p81 = scmp.ne.s32.totalorder %s69, %s70
      %p82 = scmp.eq.s32.totalorder %s25, 1
      %p83 = por %p81, %p82
      %p85 = scmp.ne.s32.totalorder %s70, %s84
      %p86 = scmp.eq.s32.totalorder %s25, 0
      %p87 = por %p85, %p86
      %s89 = sadd.s32 %s88, 1
      %p92 = scmp.eq.s32.totalorder %s19, 1
      %p93 = scmp.ne.s32.totalorder %s88, %s90
      %p94 = scmp.eq.s32.totalorder %s19, 0
      %p95 = por %p93, %p94
      %p96 = scmp.ne.s32.totalorder %s88, %s90
      %p97 = scmp.eq.s32.totalorder %s24, 1
      %p98 = por %p96, %p97
      %p99 = scmp.ne.s32.totalorder %s90, %s91
      %p100 = scmp.eq.s32.totalorder %s24, 0
      %p101 = por %p99, %p100
      %p102 = scmp.ne.s32.totalorder %s90, %s91
      %p103 = scmp.eq.s32.totalorder %s25, 1
      %p104 = por %p102, %p103
      %p106 = scmp.ne.s32.totalorder %s91, %s105
      %p107 = scmp.eq.s32.totalorder %s25, 0
      %p108 = por %p106, %p107
      %s109 = ssub.s32 %s27, %s34
      %s110 = ssub.s32 %s26, %s38
      %s111 = sor.u32 %s109, %s110
      %p112 = scmp.eq.s32.totalorder %s111, 0
      %s114 = sadd.s32 %s113, 1
      %s115 = scalar_select %p112, %s113, %s114
      %p118 = pneg %p112
      %p119 = scmp.eq.s32.totalorder %s19, 1
      %p120 = por %p118, %p119
      %p121 = scmp.ne.s32.totalorder %s113, %s116
      %p122 = scmp.eq.s32.totalorder %s19, 0
      %p123 = por %p121, %p122
      %p124 = scmp.ne.s32.totalorder %s113, %s116
      %p125 = scmp.eq.s32.totalorder %s24, 1
      %p126 = por %p124, %p125
      %p127 = scmp.ne.s32.totalorder %s116, %s117
      %p128 = scmp.eq.s32.totalorder %s24, 0
      %p129 = por %p127, %p128
      %p130 = scmp.ne.s32.totalorder %s116, %s117
      %p131 = scmp.eq.s32.totalorder %s25, 1
      %p132 = por %p130, %p131
      %p134 = scmp.ne.s32.totalorder %s117, %s133
      %p135 = scmp.eq.s32.totalorder %s25, 0
      %p136 = por %p134, %p135
      %s137 = ssub.s32 %s26, %s38
      %p138 = scmp.eq.s32.totalorder %s137, 0
      %s140 = sadd.s32 %s139, 1
      %s141 = scalar_select %p138, %s139, %s140
      %p144 = pneg %p138
      %p145 = scmp.eq.s32.totalorder %s19, 1
      %p146 = por %p144, %p145
      %p147 = scmp.ne.s32.totalorder %s139, %s142
      %p148 = scmp.eq.s32.totalorder %s19, 0
      %p149 = por %p147, %p148
      %p150 = scmp.ne.s32.totalorder %s139, %s142
      %p151 = scmp.eq.s32.totalorder %s24, 1
      %p152 = por %p150, %p151
      %p153 = scmp.ne.s32.totalorder %s142, %s143
      %p154 = scmp.eq.s32.totalorder %s24, 0
      %p155 = por %p153, %p154
      %p156 = scmp.ne.s32.totalorder %s142, %s143
      %p157 = scmp.eq.s32.totalorder %s25, 1
      %p158 = por %p156, %p157
      %p160 = scmp.ne.s32.totalorder %s143, %s159
      %p161 = scmp.eq.s32.totalorder %s25, 0
      %p162 = por %p160, %p161
      %p163 = scmp.le.s32.totalorder 1, %s19
      %p164 = scmp.lt.s32.totalorder %s19, 3
      %p165 = pnand %p163, %p164
      %p166 = pneg %p165
      // Predicated region
      $region9: #{tpu_custom_call.1} parent=5 // pred_check
        _
      $region10: #{tpu_custom_call.1} parent=5 // pred_check_branch
        %168 = sbr.rel (%p165) target = $region12
      $region11: #{tpu_custom_call.1} parent=5 // pred_region
        %s169 = ssub.s32 %s19, 1
        // Predicated region
        $region13: #{tpu_custom_call.1} parent=11 // pred_check
          %p170 = pneg %p80
        $region14: #{tpu_custom_call.1} parent=11 // pred_check_branch
          %172 = sbr.rel (%p170) target = $region16
        $region15: #{tpu_custom_call.1} parent=11 // pred_region
          %s174 = ssub.s32 128, 128
          %175 = vsyncadd [#allocation8], %s174
          %s176 = sshll.u32 [#allocation7], 4
          %s177 = int_to_ptr.vmem [resolvable:$true] %s176
          %182 = dma.hbm_to_vmem [thread:$0]  %s1, 128, %s177, [#allocation8], 64, 64, 4
        $region16: #{tpu_custom_call.1} parent=11 // pred_fallthru
          _
        // Predicated region
        $region17: #{tpu_custom_call.1} parent=11 // pred_check
          %p183 = pneg %p101
        $region18: #{tpu_custom_call.1} parent=11 // pred_check_branch
          %185 = sbr.rel (%p183) target = $region20
        $region19: #{tpu_custom_call.1} parent=11 // pred_region
          %s187 = ssub.s32 2048, 2048
          %188 = vsyncadd [#allocation8], %s187
          %s189 = sshll.u32 [#allocation9], 4
          %s190 = int_to_ptr.vmem [resolvable:$true] %s189
          %195 = dma.hbm_to_vmem [thread:$0]  %s2, 2048, %s190, [#allocation8], 64, 64, 4
        $region20: #{tpu_custom_call.1} parent=11 // pred_fallthru
          _
      $region12: #{tpu_custom_call.1} parent=5 // pred_fallthru
        _
      %p196 = scmp.lt.s32.totalorder %s19, 2
      // Predicated region
      $region21: #{tpu_custom_call.1} parent=5 // pred_check
        %p197 = pneg %p196
      $region22: #{tpu_custom_call.1} parent=5 // pred_check_branch
        %199 = sbr.rel (%p197) target = $region24
      $region23: #{tpu_custom_call.1} parent=5 // pred_region
        // Predicated region
        $region25: #{tpu_custom_call.1} parent=23 // pred_check
          %p200 = pneg %p53
        $region26: #{tpu_custom_call.1} parent=23 // pred_check_branch
          %202 = sbr.rel (%p200) target = $region28
        $region27: #{tpu_custom_call.1} parent=23 // pred_region
          %s203 = sand.u32 %s43, 1
          %s204 = scalar_lea.sflag [#allocation5], %s203
          %s205 = sand.u32 %s43, 1
          %s206 = smul.addr %s205, 4
          %s207 = scalar_lea.vmem [#allocation4], %s206
          %s208 = smul.u32 4, %s27
          %s210 = ssub.s32 64, 64
          %211 = vsyncadd %s204, %s210
          %s212 = sadd.s32 %s26, %s208
          %s213 = smul.addr %s212, 16
          %s214 = scalar_lea.hbm %s0, %s213
          %s215 = sshll.u32 %s207, 4
          %s216 = int_to_ptr.vmem [resolvable:$true] %s215
          %221 = dma.hbm_to_vmem [thread:$0]  %s214, 64, %s216, %s204, 16, 16, 1
        $region28: #{tpu_custom_call.1} parent=23 // pred_fallthru
          _
      $region24: #{tpu_custom_call.1} parent=5 // pred_fallthru
        _
      %p222 = scmp.le.s32.totalorder 1, %s19
      %p223 = scmp.lt.s32.totalorder %s19, 3
      %p224 = pnand %p222, %p223
      %p225 = pneg %p224
      // Predicated region
      $region29: #{tpu_custom_call.1} parent=5 // pred_check
        _
      $region30: #{tpu_custom_call.1} parent=5 // pred_check_branch
        %227 = sbr.rel (%p224) target = $region32
      $region31: #{tpu_custom_call.1} parent=5 // pred_region
        %s228 = ssub.s32 %s19, 1
        %s229 = sand.u32 %s46, 1
        %s230 = scalar_lea.sflag [#allocation5], %s229
        %s231 = sand.u32 %s46, 1
        %s232 = smul.addr %s231, 4
        %s233 = scalar_lea.vmem [#allocation4], %s232
        // Predicated region
        $region33: #{tpu_custom_call.1} parent=31 // pred_check
          %p234 = pneg %p59
        $region34: #{tpu_custom_call.1} parent=31 // pred_check_branch
          %236 = sbr.rel (%p234) target = $region36
        $region35: #{tpu_custom_call.1} parent=31 // pred_region
          %237 = dma.done %s230, 64
        $region36: #{tpu_custom_call.1} parent=31 // pred_fallthru
          _
        // Predicated region
        $region37: #{tpu_custom_call.1} parent=31 // pred_check
          %p238 = pneg %p80
        $region38: #{tpu_custom_call.1} parent=31 // pred_check_branch
          %240 = sbr.rel (%p238) target = $region40
        $region39: #{tpu_custom_call.1} parent=31 // pred_region
          %241 = dma.done [#allocation8], 128
        $region40: #{tpu_custom_call.1} parent=31 // pred_fallthru
          _
        // Predicated region
        $region41: #{tpu_custom_call.1} parent=31 // pred_check
          %p242 = pneg %p101
        $region42: #{tpu_custom_call.1} parent=31 // pred_check_branch
          %244 = sbr.rel (%p242) target = $region44
        $region43: #{tpu_custom_call.1} parent=31 // pred_region
          %245 = dma.done [#allocation8], 2048
        $region44: #{tpu_custom_call.1} parent=31 // pred_fallthru
          _
        %s246 = sand.u32 %s46, 1
        %s247 = scalar_lea.sflag [#allocation5], %s246
        %s248 = sand.u32 %s46, 1
        %s249 = smul.addr %s248, 4
        %s250 = scalar_lea.vmem [#allocation4], %s249
        %p251 = pneg %p59
        %p252 = pneg %p56
        %p253 = pneg %p80
        %p254 = pneg %p77
        %p255 = pneg %p101
        %p256 = pneg %p98
        %p257 = pneg %p129
        %p258 = pneg %p126
        %s259 = sand.u32 %s116, 1
        %s260 = scalar_lea.sflag [#allocation6], %s259
        %s261 = sand.u32 %s116, 1
        %s262 = smul.addr %s261, 8
        %s263 = scalar_lea.vmem [#allocation10], %s262
        %p264 = pneg %p155
        %p265 = pneg %p152
        %s266 = smul.u32 4, %s29
        %s267 = smul.u32 4, %s29
        %p269 = scmp.eq.s32.totalorder %s29, 0
        // Predicated region
        $region45: #{tpu_custom_call.1} parent=31 // pred_check
          %p270 = pneg %p269
        $region46: #{tpu_custom_call.1} parent=31 // pred_check_branch
          %272 = sbr.rel (%p270) target = $region48
        $region47: #{tpu_custom_call.1} parent=31 // pred_region
          %273 = vst [vmem:[#allocation2] sm:$0x3] 0.0
          %274 = vst [vmem:[#allocation2 + $0x2] sm:$0x3] 0.0
        $region48: #{tpu_custom_call.1} parent=31 // pred_fallthru
          _
        %v275 = vld [vmem:[%s233] sm:$0x1]
        %v276 = vld [vmem:[#allocation7] sm:$0xf]
        %v277 = vld [vmem:[#allocation7 + $0x4] sm:$0xf]
        %v280 = vunpack.c.l.b16 %v276
        %v281 = vunpack.c.l.b16 %v277
        %v282 = vpack.c.b16 %v281, %v280
        %vm284 = vcmask 130048
        %v286 = vsel %vm284, %v275, 0
        %288 = vmatprep.subr.bf16.mxu0 0
        %289 = vmatpush1.bf16.msra.mxu0 %v282
        %290 = vmatprep.subr.bf16.mxu0 0
        %291 = vmatpush1.bf16.msra.mxu0 0
        %292 = vmatprep.subr.bf16.mxu0 0
        %293 = vmatpush1.bf16.msra.mxu0 0
        %294 = vmatprep.subr.bf16.mxu0 0
        %295 = vmatpush1.bf16.msra.mxu0 0
        %296 = vmatprep.subr.bf16.mxu0 0
        %297 = vmatpush1.bf16.msra.mxu0 0
        %298 = vmatprep.subr.bf16.mxu0 0
        %299 = vmatpush1.bf16.msra.mxu0 0
        %300 = vmatprep.subr.bf16.mxu0 0
        %301 = vmatpush1.bf16.msra.mxu0 0
        %302 = vmatprep.subr.bf16.mxu0 0
        %303 = vmatpush1.bf16.msra.mxu0 0
        %304 = vmatprep.subr.bf16.mxu0 0
        %305 = vmatpush1.bf16.msra.mxu0 0
        %306 = vmatprep.subr.bf16.mxu0 0
        %307 = vmatpush1.bf16.msra.mxu0 0
        %308 = vmatprep.subr.bf16.mxu0 0
        %309 = vmatpush1.bf16.msra.mxu0 0
        %310 = vmatprep.subr.bf16.mxu0 0
        %311 = vmatpush1.bf16.msra.mxu0 0
        %312 = vmatprep.subr.bf16.mxu0 0
        %313 = vmatpush1.bf16.msra.mxu0 0
        %314 = vmatprep.subr.bf16.mxu0 0
        %315 = vmatpush1.bf16.msra.mxu0 0
        %316 = vmatprep.subr.bf16.mxu0 0
        %317 = vmatpush1.bf16.msra.mxu0 0
        %318 = vmatprep.subr.bf16.mxu0 0
        %319 = vmatpush1.bf16.msra.mxu0 0
        %320 = vmatprep.mubr.bf16.mxu0 0
        %321 = vmatmul.mubr.bf16.gmra.mrb[0].mxu0 %v286
        %v322 = vpop.f32.mrb[0].mxu0
        %v323 = vadd.f32 0.0, %v322
        %v324 = vpop.f32.mrb[0].mxu0
        %v325 = vpop.f32.mrb[0].mxu0
        %v326 = vpop.f32.mrb[0].mxu0
        %327 = vdwg.mxu0
        %328 = vst [vmem:[#allocation3] sm:$0x3] %v323
        %s329 = scalar_lea.vmem %s233, 1 [#allocation4]
        %v330 = vld [vmem:[%s329] sm:$0x1]
        %v331 = vld [vmem:[#allocation7] sm:$0xf]
        %v332 = vld [vmem:[#allocation7 + $0x4] sm:$0xf]
        %v335 = vunpack.c.l.b16 %v331
        %v336 = vunpack.c.l.b16 %v332
        %v337 = vpack.c.b16 %v336, %v335
        %v340 = vsel %vm284, %v330, 0
        %342 = vmatprep.subr.bf16.mxu0 0
        %343 = vmatpush1.bf16.msra.mxu0 %v337
        %344 = vmatprep.subr.bf16.mxu0 0
        %345 = vmatpush1.bf16.msra.mxu0 0
        %346 = vmatprep.subr.bf16.mxu0 0
        %347 = vmatpush1.bf16.msra.mxu0 0
        %348 = vmatprep.subr.bf16.mxu0 0
        %349 = vmatpush1.bf16.msra.mxu0 0
        %350 = vmatprep.subr.bf16.mxu0 0
        %351 = vmatpush1.bf16.msra.mxu0 0
        %352 = vmatprep.subr.bf16.mxu0 0
        %353 = vmatpush1.bf16.msra.mxu0 0
        %354 = vmatprep.subr.bf16.mxu0 0
        %355 = vmatpush1.bf16.msra.mxu0 0
        %356 = vmatprep.subr.bf16.mxu0 0
        %357 = vmatpush1.bf16.msra.mxu0 0
        %358 = vmatprep.subr.bf16.mxu0 0
        %359 = vmatpush1.bf16.msra.mxu0 0
        %360 = vmatprep.subr.bf16.mxu0 0
        %361 = vmatpush1.bf16.msra.mxu0 0
        %362 = vmatprep.subr.bf16.mxu0 0
        %363 = vmatpush1.bf16.msra.mxu0 0
        %364 = vmatprep.subr.bf16.mxu0 0
        %365 = vmatpush1.bf16.msra.mxu0 0
        %366 = vmatprep.subr.bf16.mxu0 0
        %367 = vmatpush1.bf16.msra.mxu0 0
        %368 = vmatprep.subr.bf16.mxu0 0
        %369 = vmatpush1.bf16.msra.mxu0 0
        %370 = vmatprep.subr.bf16.mxu0 0
        %371 = vmatpush1.bf16.msra.mxu0 0
        %372 = vmatprep.subr.bf16.mxu0 0
        %373 = vmatpush1.bf16.msra.mxu0 0
        %374 = vmatprep.mubr.bf16.mxu0 0
        %375 = vmatmul.mubr.bf16.gmra.mrb[0].mxu0 %v340
        %v376 = vpop.f32.mrb[0].mxu0
        %v377 = vadd.f32 0.0, %v376
        %v378 = vpop.f32.mrb[0].mxu0
        %v379 = vpop.f32.mrb[0].mxu0
        %v380 = vpop.f32.mrb[0].mxu0
        %381 = vdwg.mxu0
        %s382 = scalar_lea.vmem [#allocation3], 2
        %383 = vst [vmem:[%s382] sm:$0x3] %v377
        %s384 = scalar_lea.vmem %s233, 2 [#allocation4]
        %v385 = vld [vmem:[%s384] sm:$0x1]
        %v386 = vld [vmem:[#allocation7] sm:$0xf]
        %v387 = vld [vmem:[#allocation7 + $0x4] sm:$0xf]
        %v390 = vunpack.c.l.b16 %v386
        %v391 = vunpack.c.l.b16 %v387
        %v392 = vpack.c.b16 %v391, %v390
        %v395 = vsel %vm284, %v385, 0
        %397 = vmatprep.subr.bf16.mxu0 0
        %398 = vmatpush1.bf16.msra.mxu0 %v392
        %399 = vmatprep.subr.bf16.mxu0 0
        %400 = vmatpush1.bf16.msra.mxu0 0
        %401 = vmatprep.subr.bf16.mxu0 0
        %402 = vmatpush1.bf16.msra.mxu0 0
        %403 = vmatprep.subr.bf16.mxu0 0
        %404 = vmatpush1.bf16.msra.mxu0 0
        %405 = vmatprep.subr.bf16.mxu0 0
        %406 = vmatpush1.bf16.msra.mxu0 0
        %407 = vmatprep.subr.bf16.mxu0 0
        %408 = vmatpush1.bf16.msra.mxu0 0
        %409 = vmatprep.subr.bf16.mxu0 0
        %410 = vmatpush1.bf16.msra.mxu0 0
        %411 = vmatprep.subr.bf16.mxu0 0
        %412 = vmatpush1.bf16.msra.mxu0 0
        %413 = vmatprep.subr.bf16.mxu0 0
        %414 = vmatpush1.bf16.msra.mxu0 0
        %415 = vmatprep.subr.bf16.mxu0 0
        %416 = vmatpush1.bf16.msra.mxu0 0
        %417 = vmatprep.subr.bf16.mxu0 0
        %418 = vmatpush1.bf16.msra.mxu0 0
        %419 = vmatprep.subr.bf16.mxu0 0
        %420 = vmatpush1.bf16.msra.mxu0 0
        %421 = vmatprep.subr.bf16.mxu0 0
        %422 = vmatpush1.bf16.msra.mxu0 0
        %423 = vmatprep.subr.bf16.mxu0 0
        %424 = vmatpush1.bf16.msra.mxu0 0
        %425 = vmatprep.subr.bf16.mxu0 0
        %426 = vmatpush1.bf16.msra.mxu0 0
        %427 = vmatprep.subr.bf16.mxu0 0
        %428 = vmatpush1.bf16.msra.mxu0 0
        %429 = vmatprep.mubr.bf16.mxu0 0
        %430 = vmatmul.mubr.bf16.gmra.mrb[0].mxu0 %v395
        %v431 = vpop.f32.mrb[0].mxu0
        %v432 = vadd.f32 0.0, %v431
        %v433 = vpop.f32.mrb[0].mxu0
        %v434 = vpop.f32.mrb[0].mxu0
        %v435 = vpop.f32.mrb[0].mxu0
        %436 = vdwg.mxu0
        %s437 = scalar_lea.vmem [#allocation3], 4
        %438 = vst [vmem:[%s437] sm:$0x3] %v432
        %s439 = scalar_lea.vmem %s233, 3 [#allocation4]
        %v440 = vld [vmem:[%s439] sm:$0x1]
        %v441 = vld [vmem:[#allocation7] sm:$0xf]
        %v442 = vld [vmem:[#allocation7 + $0x4] sm:$0xf]
        %v445 = vunpack.c.l.b16 %v441
        %v446 = vunpack.c.l.b16 %v442
        %v447 = vpack.c.b16 %v446, %v445
        %v450 = vsel %vm284, %v440, 0
        %452 = vmatprep.subr.bf16.mxu0 0
        %453 = vmatpush1.bf16.msra.mxu0 %v447
        %454 = vmatprep.subr.bf16.mxu0 0
        %455 = vmatpush1.bf16.msra.mxu0 0
        %456 = vmatprep.subr.bf16.mxu0 0
        %457 = vmatpush1.bf16.msra.mxu0 0
        %458 = vmatprep.subr.bf16.mxu0 0
        %459 = vmatpush1.bf16.msra.mxu0 0
        %460 = vmatprep.subr.bf16.mxu0 0
        %461 = vmatpush1.bf16.msra.mxu0 0
        %462 = vmatprep.subr.bf16.mxu0 0
        %463 = vmatpush1.bf16.msra.mxu0 0
        %464 = vmatprep.subr.bf16.mxu0 0
        %465 = vmatpush1.bf16.msra.mxu0 0
        %466 = vmatprep.subr.bf16.mxu0 0
        %467 = vmatpush1.bf16.msra.mxu0 0
        %468 = vmatprep.subr.bf16.mxu0 0
        %469 = vmatpush1.bf16.msra.mxu0 0
        %470 = vmatprep.subr.bf16.mxu0 0
        %471 = vmatpush1.bf16.msra.mxu0 0
        %472 = vmatprep.subr.bf16.mxu0 0
        %473 = vmatpush1.bf16.msra.mxu0 0
        %474 = vmatprep.subr.bf16.mxu0 0
        %475 = vmatpush1.bf16.msra.mxu0 0
        %476 = vmatprep.subr.bf16.mxu0 0
        %477 = vmatpush1.bf16.msra.mxu0 0
        %478 = vmatprep.subr.bf16.mxu0 0
        %479 = vmatpush1.bf16.msra.mxu0 0
        %480 = vmatprep.subr.bf16.mxu0 0
        %481 = vmatpush1.bf16.msra.mxu0 0
        %482 = vmatprep.subr.bf16.mxu0 0
        %483 = vmatpush1.bf16.msra.mxu0 0
        %484 = vmatprep.mubr.bf16.mxu0 0
        %485 = vmatmul.mubr.bf16.gmra.mrb[0].mxu0 %v450
        %v486 = vpop.f32.mrb[0].mxu0
        %v487 = vadd.f32 0.0, %v486
        %v488 = vpop.f32.mrb[0].mxu0
        %v489 = vpop.f32.mrb[0].mxu0
        %v490 = vpop.f32.mrb[0].mxu0
        %491 = vdwg.mxu0
        %s492 = scalar_lea.vmem [#allocation3], 6
        %493 = vst [vmem:[%s492] sm:$0x3] %v487
        %v494 = vld [vmem:[#allocation2] sm:$0x3]
        %s495 = scalar_lea.vmem [#allocation2], 2
        %v496 = vld [vmem:[%s495] sm:$0x3]
        %v497 = vld [vmem:[#allocation3] sm:$0x3]
        %v498 = vpack.c.bf16 %v494, %v494
        %v499 = vld [vmem:[#allocation9] sm:$0xf]
        %v500 = vld [vmem:[#allocation9 + $0x4] sm:$0xf]
        %v501 = vld [vmem:[#allocation9 + $0x8] sm:$0xf]
        %v502 = vld [vmem:[#allocation9 + $0xc] sm:$0xf]
        %v503 = vld [vmem:[#allocation9 + $0x10] sm:$0xf]
        %v504 = vld [vmem:[#allocation9 + $0x14] sm:$0xf]
        %v505 = vld [vmem:[#allocation9 + $0x18] sm:$0xf]
        %v506 = vld [vmem:[#allocation9 + $0x1c] sm:$0xf]
        %v507 = vld [vmem:[#allocation9 + $0x20] sm:$0xf]
        %v508 = vld [vmem:[#allocation9 + $0x24] sm:$0xf]
        %v509 = vld [vmem:[#allocation9 + $0x28] sm:$0xf]
        %v510 = vld [vmem:[#allocation9 + $0x2c] sm:$0xf]
        %v511 = vld [vmem:[#allocation9 + $0x30] sm:$0xf]
        %v512 = vld [vmem:[#allocation9 + $0x34] sm:$0xf]
        %v513 = vld [vmem:[#allocation9 + $0x38] sm:$0xf]
        %v514 = vld [vmem:[#allocation9 + $0x3c] sm:$0xf]
        %v531 = vunpack.c.l.b16 %v499
        %v532 = vunpack.c.l.b16 %v500
        %v533 = vunpack.c.l.b16 %v501
        %v534 = vunpack.c.l.b16 %v502
        %v535 = vunpack.c.l.b16 %v503
        %v536 = vunpack.c.l.b16 %v504
        %v537 = vunpack.c.l.b16 %v505
        %v538 = vunpack.c.l.b16 %v506
        %v539 = vunpack.c.l.b16 %v507
        %v540 = vunpack.c.l.b16 %v508
        %v541 = vunpack.c.l.b16 %v509
        %v542 = vunpack.c.l.b16 %v510
        %v543 = vunpack.c.l.b16 %v511
        %v544 = vunpack.c.l.b16 %v512
        %v545 = vunpack.c.l.b16 %v513
        %v546 = vunpack.c.l.b16 %v514
        %v547 = vpack.c.b16 %v532, %v531
        %v548 = vpack.c.b16 %v534, %v533
        %v549 = vpack.c.b16 %v536, %v535
        %v550 = vpack.c.b16 %v538, %v537
        %v551 = vpack.c.b16 %v540, %v539
        %v552 = vpack.c.b16 %v542, %v541
        %v553 = vpack.c.b16 %v544, %v543
        %v554 = vpack.c.b16 %v546, %v545
        %563 = vmatprep.subr.bf16.mxu0 0
        %564 = vmatpush1.bf16.msra.mxu0 %v547
        %565 = vmatprep.subr.bf16.mxu0 0
        %566 = vmatpush1.bf16.msra.mxu0 %v548
        %567 = vmatprep.subr.bf16.mxu0 0
        %568 = vmatpush1.bf16.msra.mxu0 %v549
        %569 = vmatprep.subr.bf16.mxu0 0
        %570 = vmatpush1.bf16.msra.mxu0 %v550
        %571 = vmatprep.subr.bf16.mxu0 0
        %572 = vmatpush1.bf16.msra.mxu0 %v551
        %573 = vmatprep.subr.bf16.mxu0 0
        %574 = vmatpush1.bf16.msra.mxu0 %v552
        %575 = vmatprep.subr.bf16.mxu0 0
        %576 = vmatpush1.bf16.msra.mxu0 %v553
        %577 = vmatprep.subr.bf16.mxu0 0
        %578 = vmatpush1.bf16.msra.mxu0 %v554
        %579 = vmatprep.subr.bf16.mxu0 0
        %580 = vmatpush1.bf16.msra.mxu0 0
        %581 = vmatprep.subr.bf16.mxu0 0
        %582 = vmatpush1.bf16.msra.mxu0 0
        %583 = vmatprep.subr.bf16.mxu0 0
        %584 = vmatpush1.bf16.msra.mxu0 0
        %585 = vmatprep.subr.bf16.mxu0 0
        %586 = vmatpush1.bf16.msra.mxu0 0
        %587 = vmatprep.subr.bf16.mxu0 0
        %588 = vmatpush1.bf16.msra.mxu0 0
        %589 = vmatprep.subr.bf16.mxu0 0
        %590 = vmatpush1.bf16.msra.mxu0 0
        %591 = vmatprep.subr.bf16.mxu0 0
        %592 = vmatpush1.bf16.msra.mxu0 0
        %593 = vmatprep.subr.bf16.mxu0 0
        %594 = vmatpush1.bf16.msra.mxu0 0
        %595 = vmatprep.mubr.bf16.mxu0 0
        %596 = vmatmul.mubr.bf16.gmra.mrb[0].mxu0 %v498
        %v597 = vpop.f32.mrb[0].mxu0
        %v598 = vadd.f32 0.0, %v597
        %v599 = vpop.f32.mrb[0].mxu0
        %v600 = vpop.f32.mrb[0].mxu0
        %v601 = vpop.f32.mrb[0].mxu0
        %602 = vdwg.mxu0
        %v603 = vadd.f32 %v497, %v598
        %v604 = vmax.f32 %v603, 0.0
        %v605 = vadd.f32 %v604, %v496
        %v606 = vpack.c.bf16 %v605, %v605
        %s607 = scalar_lea.vmem [#allocation9], 64
        %v608 = vld [vmem:[%s607] sm:$0xf]
        %v609 = vld [vmem:[%s607 + $0x4] sm:$0xf]
        %v610 = vld [vmem:[%s607 + $0x8] sm:$0xf]
        %v611 = vld [vmem:[%s607 + $0xc] sm:$0xf]
        %v612 = vld [vmem:[%s607 + $0x10] sm:$0xf]
        %v613 = vld [vmem:[%s607 + $0x14] sm:$0xf]
        %v614 = vld [vmem:[%s607 + $0x18] sm:$0xf]
        %v615 = vld [vmem:[%s607 + $0x1c] sm:$0xf]
        %v616 = vld [vmem:[%s607 + $0x20] sm:$0xf]
        %v617 = vld [vmem:[%s607 + $0x24] sm:$0xf]
        %v618 = vld [vmem:[%s607 + $0x28] sm:$0xf]
        %v619 = vld [vmem:[%s607 + $0x2c] sm:$0xf]
        %v620 = vld [vmem:[%s607 + $0x30] sm:$0xf]
        %v621 = vld [vmem:[%s607 + $0x34] sm:$0xf]
        %v622 = vld [vmem:[%s607 + $0x38] sm:$0xf]
        %v623 = vld [vmem:[%s607 + $0x3c] sm:$0xf]
        %v640 = vunpack.c.l.b16 %v608
        %v641 = vunpack.c.l.b16 %v609
        %v642 = vunpack.c.l.b16 %v610
        %v643 = vunpack.c.l.b16 %v611
        %v644 = vunpack.c.l.b16 %v612
        %v645 = vunpack.c.l.b16 %v613
        %v646 = vunpack.c.l.b16 %v614
        %v647 = vunpack.c.l.b16 %v615
        %v648 = vunpack.c.l.b16 %v616
        %v649 = vunpack.c.l.b16 %v617
        %v650 = vunpack.c.l.b16 %v618
        %v651 = vunpack.c.l.b16 %v619
        %v652 = vunpack.c.l.b16 %v620
        %v653 = vunpack.c.l.b16 %v621
        %v654 = vunpack.c.l.b16 %v622
        %v655 = vunpack.c.l.b16 %v623
        %v656 = vpack.c.b16 %v641, %v640
        %v657 = vpack.c.b16 %v643, %v642
        %v658 = vpack.c.b16 %v645, %v644
        %v659 = vpack.c.b16 %v647, %v646
        %v660 = vpack.c.b16 %v649, %v648
        %v661 = vpack.c.b16 %v651, %v650
        %v662 = vpack.c.b16 %v653, %v652
        %v663 = vpack.c.b16 %v655, %v654
        %672 = vmatprep.subr.bf16.mxu0 0
        %673 = vmatpush1.bf16.msra.mxu0 %v656
        %674 = vmatprep.subr.bf16.mxu0 0
        %675 = vmatpush1.bf16.msra.mxu0 %v657
        %676 = vmatprep.subr.bf16.mxu0 0
        %677 = vmatpush1.bf16.msra.mxu0 %v658
        %678 = vmatprep.subr.bf16.mxu0 0
        %679 = vmatpush1.bf16.msra.mxu0 %v659
        %680 = vmatprep.subr.bf16.mxu0 0
        %681 = vmatpush1.bf16.msra.mxu0 %v660
        %682 = vmatprep.subr.bf16.mxu0 0
        %683 = vmatpush1.bf16.msra.mxu0 %v661
        %684 = vmatprep.subr.bf16.mxu0 0
        %685 = vmatpush1.bf16.msra.mxu0 %v662
        %686 = vmatprep.subr.bf16.mxu0 0
        %687 = vmatpush1.bf16.msra.mxu0 %v663
        %688 = vmatprep.subr.bf16.mxu0 0
        %689 = vmatpush1.bf16.msra.mxu0 0
        %690 = vmatprep.subr.bf16.mxu0 0
        %691 = vmatpush1.bf16.msra.mxu0 0
        %692 = vmatprep.subr.bf16.mxu0 0
        %693 = vmatpush1.bf16.msra.mxu0 0
        %694 = vmatprep.subr.bf16.mxu0 0
        %695 = vmatpush1.bf16.msra.mxu0 0
        %696 = vmatprep.subr.bf16.mxu0 0
        %697 = vmatpush1.bf16.msra.mxu0 0
        %698 = vmatprep.subr.bf16.mxu0 0
        %699 = vmatpush1.bf16.msra.mxu0 0
        %700 = vmatprep.subr.bf16.mxu0 0
        %701 = vmatpush1.bf16.msra.mxu0 0
        %702 = vmatprep.subr.bf16.mxu0 0
        %703 = vmatpush1.bf16.msra.mxu0 0
        %704 = vmatprep.mubr.bf16.mxu0 0
        %705 = vmatmul.mubr.bf16.gmra.mrb[0].mxu0 %v606
        %v706 = vpop.f32.mrb[0].mxu0
        %v707 = vadd.f32 0.0, %v706
        %v708 = vpop.f32.mrb[0].mxu0
        %v709 = vpop.f32.mrb[0].mxu0
        %v710 = vpop.f32.mrb[0].mxu0
        %711 = vdwg.mxu0
        %v712 = vmax.f32 %v707, 0.0
        %713 = vst [vmem:[%s263] sm:$0x3] %v712
        %v714 = vld [vmem:[%s382] sm:$0x3]
        %v715 = vpack.c.bf16 %v604, %v604
        %v716 = vld [vmem:[#allocation9] sm:$0xf]
        %v717 = vld [vmem:[#allocation9 + $0x4] sm:$0xf]
        %v718 = vld [vmem:[#allocation9 + $0x8] sm:$0xf]
        %v719 = vld [vmem:[#allocation9 + $0xc] sm:$0xf]
        %v720 = vld [vmem:[#allocation9 + $0x10] sm:$0xf]
        %v721 = vld [vmem:[#allocation9 + $0x14] sm:$0xf]
        %v722 = vld [vmem:[#allocation9 + $0x18] sm:$0xf]
        %v723 = vld [vmem:[#allocation9 + $0x1c] sm:$0xf]
        %v724 = vld [vmem:[#allocation9 + $0x20] sm:$0xf]
        %v725 = vld [vmem:[#allocation9 + $0x24] sm:$0xf]
        %v726 = vld [vmem:[#allocation9 + $0x28] sm:$0xf]
        %v727 = vld [vmem:[#allocation9 + $0x2c] sm:$0xf]
        %v728 = vld [vmem:[#allocation9 + $0x30] sm:$0xf]
        %v729 = vld [vmem:[#allocation9 + $0x34] sm:$0xf]
        %v730 = vld [vmem:[#allocation9 + $0x38] sm:$0xf]
        %v731 = vld [vmem:[#allocation9 + $0x3c] sm:$0xf]
        %v748 = vunpack.c.l.b16 %v716
        %v749 = vunpack.c.l.b16 %v717
        %v750 = vunpack.c.l.b16 %v718
        %v751 = vunpack.c.l.b16 %v719
        %v752 = vunpack.c.l.b16 %v720
        %v753 = vunpack.c.l.b16 %v721
        %v754 = vunpack.c.l.b16 %v722
        %v755 = vunpack.c.l.b16 %v723
        %v756 = vunpack.c.l.b16 %v724
        %v757 = vunpack.c.l.b16 %v725
        %v758 = vunpack.c.l.b16 %v726
        %v759 = vunpack.c.l.b16 %v727
        %v760 = vunpack.c.l.b16 %v728
        %v761 = vunpack.c.l.b16 %v729
        %v762 = vunpack.c.l.b16 %v730
        %v763 = vunpack.c.l.b16 %v731
        %v764 = vpack.c.b16 %v749, %v748
        %v765 = vpack.c.b16 %v751, %v750
        %v766 = vpack.c.b16 %v753, %v752
        %v767 = vpack.c.b16 %v755, %v754
        %v768 = vpack.c.b16 %v757, %v756
        %v769 = vpack.c.b16 %v759, %v758
        %v770 = vpack.c.b16 %v761, %v760
        %v771 = vpack.c.b16 %v763, %v762
        %780 = vmatprep.subr.bf16.mxu0 0
        %781 = vmatpush1.bf16.msra.mxu0 %v764
        %782 = vmatprep.subr.bf16.mxu0 0
        %783 = vmatpush1.bf16.msra.mxu0 %v765
        %784 = vmatprep.subr.bf16.mxu0 0
        %785 = vmatpush1.bf16.msra.mxu0 %v766
        %786 = vmatprep.subr.bf16.mxu0 0
        %787 = vmatpush1.bf16.msra.mxu0 %v767
        %788 = vmatprep.subr.bf16.mxu0 0
        %789 = vmatpush1.bf16.msra.mxu0 %v768
        %790 = vmatprep.subr.bf16.mxu0 0
        %791 = vmatpush1.bf16.msra.mxu0 %v769
        %792 = vmatprep.subr.bf16.mxu0 0
        %793 = vmatpush1.bf16.msra.mxu0 %v770
        %794 = vmatprep.subr.bf16.mxu0 0
        %795 = vmatpush1.bf16.msra.mxu0 %v771
        %796 = vmatprep.subr.bf16.mxu0 0
        %797 = vmatpush1.bf16.msra.mxu0 0
        %798 = vmatprep.subr.bf16.mxu0 0
        %799 = vmatpush1.bf16.msra.mxu0 0
        %800 = vmatprep.subr.bf16.mxu0 0
        %801 = vmatpush1.bf16.msra.mxu0 0
        %802 = vmatprep.subr.bf16.mxu0 0
        %803 = vmatpush1.bf16.msra.mxu0 0
        %804 = vmatprep.subr.bf16.mxu0 0
        %805 = vmatpush1.bf16.msra.mxu0 0
        %806 = vmatprep.subr.bf16.mxu0 0
        %807 = vmatpush1.bf16.msra.mxu0 0
        %808 = vmatprep.subr.bf16.mxu0 0
        %809 = vmatpush1.bf16.msra.mxu0 0
        %810 = vmatprep.subr.bf16.mxu0 0
        %811 = vmatpush1.bf16.msra.mxu0 0
        %812 = vmatprep.mubr.bf16.mxu0 0
        %813 = vmatmul.mubr.bf16.gmra.mrb[0].mxu0 %v715
        %v814 = vpop.f32.mrb[0].mxu0
        %v815 = vadd.f32 0.0, %v814
        %v816 = vpop.f32.mrb[0].mxu0
        %v817 = vpop.f32.mrb[0].mxu0
        %v818 = vpop.f32.mrb[0].mxu0
        %819 = vdwg.mxu0
        %v820 = vadd.f32 %v714, %v815
        %v821 = vmax.f32 %v820, 0.0
        %v822 = vadd.f32 %v821, %v712
        %v823 = vpack.c.bf16 %v822, %v822
        %v824 = vld [vmem:[%s607] sm:$0xf]
        %v825 = vld [vmem:[%s607 + $0x4] sm:$0xf]
        %v826 = vld [vmem:[%s607 + $0x8] sm:$0xf]
        %v827 = vld [vmem:[%s607 + $0xc] sm:$0xf]
        %v828 = vld [vmem:[%s607 + $0x10] sm:$0xf]
        %v829 = vld [vmem:[%s607 + $0x14] sm:$0xf]
        %v830 = vld [vmem:[%s607 + $0x18] sm:$0xf]
        %v831 = vld [vmem:[%s607 + $0x1c] sm:$0xf]
        %v832 = vld [vmem:[%s607 + $0x20] sm:$0xf]
        %v833 = vld [vmem:[%s607 + $0x24] sm:$0xf]
        %v834 = vld [vmem:[%s607 + $0x28] sm:$0xf]
        %v835 = vld [vmem:[%s607 + $0x2c] sm:$0xf]
        %v836 = vld [vmem:[%s607 + $0x30] sm:$0xf]
        %v837 = vld [vmem:[%s607 + $0x34] sm:$0xf]
        %v838 = vld [vmem:[%s607 + $0x38] sm:$0xf]
        %v839 = vld [vmem:[%s607 + $0x3c] sm:$0xf]
        %v856 = vunpack.c.l.b16 %v824
        %v857 = vunpack.c.l.b16 %v825
        %v858 = vunpack.c.l.b16 %v826
        %v859 = vunpack.c.l.b16 %v827
        %v860 = vunpack.c.l.b16 %v828
        %v861 = vunpack.c.l.b16 %v829
        %v862 = vunpack.c.l.b16 %v830
        %v863 = vunpack.c.l.b16 %v831
        %v864 = vunpack.c.l.b16 %v832
        %v865 = vunpack.c.l.b16 %v833
        %v866 = vunpack.c.l.b16 %v834
        %v867 = vunpack.c.l.b16 %v835
        %v868 = vunpack.c.l.b16 %v836
        %v869 = vunpack.c.l.b16 %v837
        %v870 = vunpack.c.l.b16 %v838
        %v871 = vunpack.c.l.b16 %v839
        %v872 = vpack.c.b16 %v857, %v856
        %v873 = vpack.c.b16 %v859, %v858
        %v874 = vpack.c.b16 %v861, %v860
        %v875 = vpack.c.b16 %v863, %v862
        %v876 = vpack.c.b16 %v865, %v864
        %v877 = vpack.c.b16 %v867, %v866
        %v878 = vpack.c.b16 %v869, %v868
        %v879 = vpack.c.b16 %v871, %v870
        %888 = vmatprep.subr.bf16.mxu0 0
        %889 = vmatpush1.bf16.msra.mxu0 %v872
        %890 = vmatprep.subr.bf16.mxu0 0
        %891 = vmatpush1.bf16.msra.mxu0 %v873
        %892 = vmatprep.subr.bf16.mxu0 0
        %893 = vmatpush1.bf16.msra.mxu0 %v874
        %894 = vmatprep.subr.bf16.mxu0 0
        %895 = vmatpush1.bf16.msra.mxu0 %v875
        %896 = vmatprep.subr.bf16.mxu0 0
        %897 = vmatpush1.bf16.msra.mxu0 %v876
        %898 = vmatprep.subr.bf16.mxu0 0
        %899 = vmatpush1.bf16.msra.mxu0 %v877
        %900 = vmatprep.subr.bf16.mxu0 0
        %901 = vmatpush1.bf16.msra.mxu0 %v878
        %902 = vmatprep.subr.bf16.mxu0 0
        %903 = vmatpush1.bf16.msra.mxu0 %v879
        %904 = vmatprep.subr.bf16.mxu0 0
        %905 = vmatpush1.bf16.msra.mxu0 0
        %906 = vmatprep.subr.bf16.mxu0 0
        %907 = vmatpush1.bf16.msra.mxu0 0
        %908 = vmatprep.subr.bf16.mxu0 0
        %909 = vmatpush1.bf16.msra.mxu0 0
        %910 = vmatprep.subr.bf16.mxu0 0
        %911 = vmatpush1.bf16.msra.mxu0 0
        %912 = vmatprep.subr.bf16.mxu0 0
        %913 = vmatpush1.bf16.msra.mxu0 0
        %914 = vmatprep.subr.bf16.mxu0 0
        %915 = vmatpush1.bf16.msra.mxu0 0
        %916 = vmatprep.subr.bf16.mxu0 0
        %917 = vmatpush1.bf16.msra.mxu0 0
        %918 = vmatprep.subr.bf16.mxu0 0
        %919 = vmatpush1.bf16.msra.mxu0 0
        %920 = vmatprep.mubr.bf16.mxu0 0
        %921 = vmatmul.mubr.bf16.gmra.mrb[0].mxu0 %v823
        %v922 = vpop.f32.mrb[0].mxu0
        %v923 = vadd.f32 0.0, %v922
        %v924 = vpop.f32.mrb[0].mxu0
        %v925 = vpop.f32.mrb[0].mxu0
        %v926 = vpop.f32.mrb[0].mxu0
        %927 = vdwg.mxu0
        %v928 = vmax.f32 %v923, 0.0
        %s929 = scalar_lea.vmem %s263, 2 [#allocation10]
        %930 = vst [vmem:[%s929] sm:$0x3] %v928
        %v931 = vld [vmem:[%s437] sm:$0x3]
        %v932 = vpack.c.bf16 %v821, %v821
        %v933 = vld [vmem:[#allocation9] sm:$0xf]
        %v934 = vld [vmem:[#allocation9 + $0x4] sm:$0xf]
        %v935 = vld [vmem:[#allocation9 + $0x8] sm:$0xf]
        %v936 = vld [vmem:[#allocation9 + $0xc] sm:$0xf]
        %v937 = vld [vmem:[#allocation9 + $0x10] sm:$0xf]
        %v938 = vld [vmem:[#allocation9 + $0x14] sm:$0xf]
        %v939 = vld [vmem:[#allocation9 + $0x18] sm:$0xf]
        %v940 = vld [vmem:[#allocation9 + $0x1c] sm:$0xf]
        %v941 = vld [vmem:[#allocation9 + $0x20] sm:$0xf]
        %v942 = vld [vmem:[#allocation9 + $0x24] sm:$0xf]
        %v943 = vld [vmem:[#allocation9 + $0x28] sm:$0xf]
        %v944 = vld [vmem:[#allocation9 + $0x2c] sm:$0xf]
        %v945 = vld [vmem:[#allocation9 + $0x30] sm:$0xf]
        %v946 = vld [vmem:[#allocation9 + $0x34] sm:$0xf]
        %v947 = vld [vmem:[#allocation9 + $0x38] sm:$0xf]
        %v948 = vld [vmem:[#allocation9 + $0x3c] sm:$0xf]
        %v965 = vunpack.c.l.b16 %v933
        %v966 = vunpack.c.l.b16 %v934
        %v967 = vunpack.c.l.b16 %v935
        %v968 = vunpack.c.l.b16 %v936
        %v969 = vunpack.c.l.b16 %v937
        %v970 = vunpack.c.l.b16 %v938
        %v971 = vunpack.c.l.b16 %v939
        %v972 = vunpack.c.l.b16 %v940
        %v973 = vunpack.c.l.b16 %v941
        %v974 = vunpack.c.l.b16 %v942
        %v975 = vunpack.c.l.b16 %v943
        %v976 = vunpack.c.l.b16 %v944
        %v977 = vunpack.c.l.b16 %v945
        %v978 = vunpack.c.l.b16 %v946
        %v979 = vunpack.c.l.b16 %v947
        %v980 = vunpack.c.l.b16 %v948
        %v981 = vpack.c.b16 %v966, %v965
        %v982 = vpack.c.b16 %v968, %v967
        %v983 = vpack.c.b16 %v970, %v969
        %v984 = vpack.c.b16 %v972, %v971
        %v985 = vpack.c.b16 %v974, %v973
        %v986 = vpack.c.b16 %v976, %v975
        %v987 = vpack.c.b16 %v978, %v977
        %v988 = vpack.c.b16 %v980, %v979
        %997 = vmatprep.subr.bf16.mxu0 0
        %998 = vmatpush1.bf16.msra.mxu0 %v981
        %999 = vmatprep.subr.bf16.mxu0 0
        %1000 = vmatpush1.bf16.msra.mxu0 %v982
        %1001 = vmatprep.subr.bf16.mxu0 0
        %1002 = vmatpush1.bf16.msra.mxu0 %v983
        %1003 = vmatprep.subr.bf16.mxu0 0
        %1004 = vmatpush1.bf16.msra.mxu0 %v984
        %1005 = vmatprep.subr.bf16.mxu0 0
        %1006 = vmatpush1.bf16.msra.mxu0 %v985
        %1007 = vmatprep.subr.bf16.mxu0 0
        %1008 = vmatpush1.bf16.msra.mxu0 %v986
        %1009 = vmatprep.subr.bf16.mxu0 0
        %1010 = vmatpush1.bf16.msra.mxu0 %v987
        %1011 = vmatprep.subr.bf16.mxu0 0
        %1012 = vmatpush1.bf16.msra.mxu0 %v988
        %1013 = vmatprep.subr.bf16.mxu0 0
        %1014 = vmatpush1.bf16.msra.mxu0 0
        %1015 = vmatprep.subr.bf16.mxu0 0
        %1016 = vmatpush1.bf16.msra.mxu0 0
        %1017 = vmatprep.subr.bf16.mxu0 0
        %1018 = vmatpush1.bf16.msra.mxu0 0
        %1019 = vmatprep.subr.bf16.mxu0 0
        %1020 = vmatpush1.bf16.msra.mxu0 0
        %1021 = vmatprep.subr.bf16.mxu0 0
        %1022 = vmatpush1.bf16.msra.mxu0 0
        %1023 = vmatprep.subr.bf16.mxu0 0
        %1024 = vmatpush1.bf16.msra.mxu0 0
        %1025 = vmatprep.subr.bf16.mxu0 0
        %1026 = vmatpush1.bf16.msra.mxu0 0
        %1027 = vmatprep.subr.bf16.mxu0 0
        %1028 = vmatpush1.bf16.msra.mxu0 0
        %1029 = vmatprep.mubr.bf16.mxu0 0
        %1030 = vmatmul.mubr.bf16.gmra.mrb[0].mxu0 %v932
        %v1031 = vpop.f32.mrb[0].mxu0
        %v1032 = vadd.f32 0.0, %v1031
        %v1033 = vpop.f32.mrb[0].mxu0
        %v1034 = vpop.f32.mrb[0].mxu0
        %v1035 = vpop.f32.mrb[0].mxu0
        %1036 = vdwg.mxu0
        %v1037 = vadd.f32 %v931, %v1032
        %v1038 = vmax.f32 %v1037, 0.0
        %v1039 = vadd.f32 %v1038, %v928
        %v1040 = vpack.c.bf16 %v1039, %v1039
        %v1041 = vld [vmem:[%s607] sm:$0xf]
        %v1042 = vld [vmem:[%s607 + $0x4] sm:$0xf]
        %v1043 = vld [vmem:[%s607 + $0x8] sm:$0xf]
        %v1044 = vld [vmem:[%s607 + $0xc] sm:$0xf]
        %v1045 = vld [vmem:[%s607 + $0x10] sm:$0xf]
        %v1046 = vld [vmem:[%s607 + $0x14] sm:$0xf]
        %v1047 = vld [vmem:[%s607 + $0x18] sm:$0xf]
        %v1048 = vld [vmem:[%s607 + $0x1c] sm:$0xf]
        %v1049 = vld [vmem:[%s607 + $0x20] sm:$0xf]
        %v1050 = vld [vmem:[%s607 + $0x24] sm:$0xf]
        %v1051 = vld [vmem:[%s607 + $0x28] sm:$0xf]
        %v1052 = vld [vmem:[%s607 + $0x2c] sm:$0xf]
        %v1053 = vld [vmem:[%s607 + $0x30] sm:$0xf]
        %v1054 = vld [vmem:[%s607 + $0x34] sm:$0xf]
        %v1055 = vld [vmem:[%s607 + $0x38] sm:$0xf]
        %v1056 = vld [vmem:[%s607 + $0x3c] sm:$0xf]
        %v1073 = vunpack.c.l.b16 %v1041
        %v1074 = vunpack.c.l.b16 %v1042
        %v1075 = vunpack.c.l.b16 %v1043
        %v1076 = vunpack.c.l.b16 %v1044
        %v1077 = vunpack.c.l.b16 %v1045
        %v1078 = vunpack.c.l.b16 %v1046
        %v1079 = vunpack.c.l.b16 %v1047
        %v1080 = vunpack.c.l.b16 %v1048
        %v1081 = vunpack.c.l.b16 %v1049
        %v1082 = vunpack.c.l.b16 %v1050
        %v1083 = vunpack.c.l.b16 %v1051
        %v1084 = vunpack.c.l.b16 %v1052
        %v1085 = vunpack.c.l.b16 %v1053
        %v1086 = vunpack.c.l.b16 %v1054
        %v1087 = vunpack.c.l.b16 %v1055
        %v1088 = vunpack.c.l.b16 %v1056
        %v1089 = vpack.c.b16 %v1074, %v1073
        %v1090 = vpack.c.b16 %v1076, %v1075
        %v1091 = vpack.c.b16 %v1078, %v1077
        %v1092 = vpack.c.b16 %v1080, %v1079
        %v1093 = vpack.c.b16 %v1082, %v1081
        %v1094 = vpack.c.b16 %v1084, %v1083
        %v1095 = vpack.c.b16 %v1086, %v1085
        %v1096 = vpack.c.b16 %v1088, %v1087
        %1105 = vmatprep.subr.bf16.mxu0 0
        %1106 = vmatpush1.bf16.msra.mxu0 %v1089
        %1107 = vmatprep.subr.bf16.mxu0 0
        %1108 = vmatpush1.bf16.msra.mxu0 %v1090
        %1109 = vmatprep.subr.bf16.mxu0 0
        %1110 = vmatpush1.bf16.msra.mxu0 %v1091
        %1111 = vmatprep.subr.bf16.mxu0 0
        %1112 = vmatpush1.bf16.msra.mxu0 %v1092
        %1113 = vmatprep.subr.bf16.mxu0 0
        %1114 = vmatpush1.bf16.msra.mxu0 %v1093
        %1115 = vmatprep.subr.bf16.mxu0 0
        %1116 = vmatpush1.bf16.msra.mxu0 %v1094
        %1117 = vmatprep.subr.bf16.mxu0 0
        %1118 = vmatpush1.bf16.msra.mxu0 %v1095
        %1119 = vmatprep.subr.bf16.mxu0 0
        %1120 = vmatpush1.bf16.msra.mxu0 %v1096
        %1121 = vmatprep.subr.bf16.mxu0 0
        %1122 = vmatpush1.bf16.msra.mxu0 0
        %1123 = vmatprep.subr.bf16.mxu0 0
        %1124 = vmatpush1.bf16.msra.mxu0 0
        %1125 = vmatprep.subr.bf16.mxu0 0
        %1126 = vmatpush1.bf16.msra.mxu0 0
        %1127 = vmatprep.subr.bf16.mxu0 0
        %1128 = vmatpush1.bf16.msra.mxu0 0
        %1129 = vmatprep.subr.bf16.mxu0 0
        %1130 = vmatpush1.bf16.msra.mxu0 0
        %1131 = vmatprep.subr.bf16.mxu0 0
        %1132 = vmatpush1.bf16.msra.mxu0 0
        %1133 = vmatprep.subr.bf16.mxu0 0
        %1134 = vmatpush1.bf16.msra.mxu0 0
        %1135 = vmatprep.subr.bf16.mxu0 0
        %1136 = vmatpush1.bf16.msra.mxu0 0
        %1137 = vmatprep.mubr.bf16.mxu0 0
        %1138 = vmatmul.mubr.bf16.gmra.mrb[0].mxu0 %v1040
        %v1139 = vpop.f32.mrb[0].mxu0
        %v1140 = vadd.f32 0.0, %v1139
        %v1141 = vpop.f32.mrb[0].mxu0
        %v1142 = vpop.f32.mrb[0].mxu0
        %v1143 = vpop.f32.mrb[0].mxu0
        %1144 = vdwg.mxu0
        %v1145 = vmax.f32 %v1140, 0.0
        %s1146 = scalar_lea.vmem %s263, 4 [#allocation10]
        %1147 = vst [vmem:[%s1146] sm:$0x3] %v1145
        %v1148 = vld [vmem:[%s492] sm:$0x3]
        %v1149 = vpack.c.bf16 %v1038, %v1038
        %v1150 = vld [vmem:[#allocation9] sm:$0xf]
        %v1151 = vld [vmem:[#allocation9 + $0x4] sm:$0xf]
        %v1152 = vld [vmem:[#allocation9 + $0x8] sm:$0xf]
        %v1153 = vld [vmem:[#allocation9 + $0xc] sm:$0xf]
        %v1154 = vld [vmem:[#allocation9 + $0x10] sm:$0xf]
        %v1155 = vld [vmem:[#allocation9 + $0x14] sm:$0xf]
        %v1156 = vld [vmem:[#allocation9 + $0x18] sm:$0xf]
        %v1157 = vld [vmem:[#allocation9 + $0x1c] sm:$0xf]
        %v1158 = vld [vmem:[#allocation9 + $0x20] sm:$0xf]
        %v1159 = vld [vmem:[#allocation9 + $0x24] sm:$0xf]
        %v1160 = vld [vmem:[#allocation9 + $0x28] sm:$0xf]
        %v1161 = vld [vmem:[#allocation9 + $0x2c] sm:$0xf]
        %v1162 = vld [vmem:[#allocation9 + $0x30] sm:$0xf]
        %v1163 = vld [vmem:[#allocation9 + $0x34] sm:$0xf]
        %v1164 = vld [vmem:[#allocation9 + $0x38] sm:$0xf]
        %v1165 = vld [vmem:[#allocation9 + $0x3c] sm:$0xf]
        %v1182 = vunpack.c.l.b16 %v1150
        %v1183 = vunpack.c.l.b16 %v1151
        %v1184 = vunpack.c.l.b16 %v1152
        %v1185 = vunpack.c.l.b16 %v1153
        %v1186 = vunpack.c.l.b16 %v1154
        %v1187 = vunpack.c.l.b16 %v1155
        %v1188 = vunpack.c.l.b16 %v1156
        %v1189 = vunpack.c.l.b16 %v1157
        %v1190 = vunpack.c.l.b16 %v1158
        %v1191 = vunpack.c.l.b16 %v1159
        %v1192 = vunpack.c.l.b16 %v1160
        %v1193 = vunpack.c.l.b16 %v1161
        %v1194 = vunpack.c.l.b16 %v1162
        %v1195 = vunpack.c.l.b16 %v1163
        %v1196 = vunpack.c.l.b16 %v1164
        %v1197 = vunpack.c.l.b16 %v1165
        %v1198 = vpack.c.b16 %v1183, %v1182
        %v1199 = vpack.c.b16 %v1185, %v1184
        %v1200 = vpack.c.b16 %v1187, %v1186
        %v1201 = vpack.c.b16 %v1189, %v1188
        %v1202 = vpack.c.b16 %v1191, %v1190
        %v1203 = vpack.c.b16 %v1193, %v1192
        %v1204 = vpack.c.b16 %v1195, %v1194
        %v1205 = vpack.c.b16 %v1197, %v1196
        %1214 = vmatprep.subr.bf16.mxu0 0
        %1215 = vmatpush1.bf16.msra.mxu0 %v1198
        %1216 = vmatprep.subr.bf16.mxu0 0
        %1217 = vmatpush1.bf16.msra.mxu0 %v1199
        %1218 = vmatprep.subr.bf16.mxu0 0
        %1219 = vmatpush1.bf16.msra.mxu0 %v1200
        %1220 = vmatprep.subr.bf16.mxu0 0
        %1221 = vmatpush1.bf16.msra.mxu0 %v1201
        %1222 = vmatprep.subr.bf16.mxu0 0
        %1223 = vmatpush1.bf16.msra.mxu0 %v1202
        %1224 = vmatprep.subr.bf16.mxu0 0
        %1225 = vmatpush1.bf16.msra.mxu0 %v1203
        %1226 = vmatprep.subr.bf16.mxu0 0
        %1227 = vmatpush1.bf16.msra.mxu0 %v1204
        %1228 = vmatprep.subr.bf16.mxu0 0
        %1229 = vmatpush1.bf16.msra.mxu0 %v1205
        %1230 = vmatprep.subr.bf16.mxu0 0
        %1231 = vmatpush1.bf16.msra.mxu0 0
        %1232 = vmatprep.subr.bf16.mxu0 0
        %1233 = vmatpush1.bf16.msra.mxu0 0
        %1234 = vmatprep.subr.bf16.mxu0 0
        %1235 = vmatpush1.bf16.msra.mxu0 0
        %1236 = vmatprep.subr.bf16.mxu0 0
        %1237 = vmatpush1.bf16.msra.mxu0 0
        %1238 = vmatprep.subr.bf16.mxu0 0
        %1239 = vmatpush1.bf16.msra.mxu0 0
        %1240 = vmatprep.subr.bf16.mxu0 0
        %1241 = vmatpush1.bf16.msra.mxu0 0
        %1242 = vmatprep.subr.bf16.mxu0 0
        %1243 = vmatpush1.bf16.msra.mxu0 0
        %1244 = vmatprep.subr.bf16.mxu0 0
        %1245 = vmatpush1.bf16.msra.mxu0 0
        %1246 = vmatprep.mubr.bf16.mxu0 0
        %1247 = vmatmul.mubr.bf16.gmra.mrb[0].mxu0 %v1149
        %v1248 = vpop.f32.mrb[0].mxu0
        %v1249 = vadd.f32 0.0, %v1248
        %v1250 = vpop.f32.mrb[0].mxu0
        %v1251 = vpop.f32.mrb[0].mxu0
        %v1252 = vpop.f32.mrb[0].mxu0
        %1253 = vdwg.mxu0
        %v1254 = vadd.f32 %v1148, %v1249
        %v1255 = vmax.f32 %v1254, 0.0
        %v1256 = vadd.f32 %v1255, %v1145
        %v1257 = vpack.c.bf16 %v1256, %v1256
        %v1258 = vld [vmem:[%s607] sm:$0xf]
        %v1259 = vld [vmem:[%s607 + $0x4] sm:$0xf]
        %v1260 = vld [vmem:[%s607 + $0x8] sm:$0xf]
        %v1261 = vld [vmem:[%s607 + $0xc] sm:$0xf]
        %v1262 = vld [vmem:[%s607 + $0x10] sm:$0xf]
        %v1263 = vld [vmem:[%s607 + $0x14] sm:$0xf]
        %v1264 = vld [vmem:[%s607 + $0x18] sm:$0xf]
        %v1265 = vld [vmem:[%s607 + $0x1c] sm:$0xf]
        %v1266 = vld [vmem:[%s607 + $0x20] sm:$0xf]
        %v1267 = vld [vmem:[%s607 + $0x24] sm:$0xf]
        %v1268 = vld [vmem:[%s607 + $0x28] sm:$0xf]
        %v1269 = vld [vmem:[%s607 + $0x2c] sm:$0xf]
        %v1270 = vld [vmem:[%s607 + $0x30] sm:$0xf]
        %v1271 = vld [vmem:[%s607 + $0x34] sm:$0xf]
        %v1272 = vld [vmem:[%s607 + $0x38] sm:$0xf]
        %v1273 = vld [vmem:[%s607 + $0x3c] sm:$0xf]
        %v1290 = vunpack.c.l.b16 %v1258
        %v1291 = vunpack.c.l.b16 %v1259
        %v1292 = vunpack.c.l.b16 %v1260
        %v1293 = vunpack.c.l.b16 %v1261
        %v1294 = vunpack.c.l.b16 %v1262
        %v1295 = vunpack.c.l.b16 %v1263
        %v1296 = vunpack.c.l.b16 %v1264
        %v1297 = vunpack.c.l.b16 %v1265
        %v1298 = vunpack.c.l.b16 %v1266
        %v1299 = vunpack.c.l.b16 %v1267
        %v1300 = vunpack.c.l.b16 %v1268
        %v1301 = vunpack.c.l.b16 %v1269
        %v1302 = vunpack.c.l.b16 %v1270
        %v1303 = vunpack.c.l.b16 %v1271
        %v1304 = vunpack.c.l.b16 %v1272
        %v1305 = vunpack.c.l.b16 %v1273
        %v1306 = vpack.c.b16 %v1291, %v1290
        %v1307 = vpack.c.b16 %v1293, %v1292
        %v1308 = vpack.c.b16 %v1295, %v1294
        %v1309 = vpack.c.b16 %v1297, %v1296
        %v1310 = vpack.c.b16 %v1299, %v1298
        %v1311 = vpack.c.b16 %v1301, %v1300
        %v1312 = vpack.c.b16 %v1303, %v1302
        %v1313 = vpack.c.b16 %v1305, %v1304
        %1322 = vmatprep.subr.bf16.mxu0 0
        %1323 = vmatpush1.bf16.msra.mxu0 %v1306
        %1324 = vmatprep.subr.bf16.mxu0 0
        %1325 = vmatpush1.bf16.msra.mxu0 %v1307
        %1326 = vmatprep.subr.bf16.mxu0 0
        %1327 = vmatpush1.bf16.msra.mxu0 %v1308
        %1328 = vmatprep.subr.bf16.mxu0 0
        %1329 = vmatpush1.bf16.msra.mxu0 %v1309
        %1330 = vmatprep.subr.bf16.mxu0 0
        %1331 = vmatpush1.bf16.msra.mxu0 %v1310
        %1332 = vmatprep.subr.bf16.mxu0 0
        %1333 = vmatpush1.bf16.msra.mxu0 %v1311
        %1334 = vmatprep.subr.bf16.mxu0 0
        %1335 = vmatpush1.bf16.msra.mxu0 %v1312
        %1336 = vmatprep.subr.bf16.mxu0 0
        %1337 = vmatpush1.bf16.msra.mxu0 %v1313
        %1338 = vmatprep.subr.bf16.mxu0 0
        %1339 = vmatpush1.bf16.msra.mxu0 0
        %1340 = vmatprep.subr.bf16.mxu0 0
        %1341 = vmatpush1.bf16.msra.mxu0 0
        %1342 = vmatprep.subr.bf16.mxu0 0
        %1343 = vmatpush1.bf16.msra.mxu0 0
        %1344 = vmatprep.subr.bf16.mxu0 0
        %1345 = vmatpush1.bf16.msra.mxu0 0
        %1346 = vmatprep.subr.bf16.mxu0 0
        %1347 = vmatpush1.bf16.msra.mxu0 0
        %1348 = vmatprep.subr.bf16.mxu0 0
        %1349 = vmatpush1.bf16.msra.mxu0 0
        %1350 = vmatprep.subr.bf16.mxu0 0
        %1351 = vmatpush1.bf16.msra.mxu0 0
        %1352 = vmatprep.subr.bf16.mxu0 0
        %1353 = vmatpush1.bf16.msra.mxu0 0
        %1354 = vmatprep.mubr.bf16.mxu0 0
        %1355 = vmatmul.mubr.bf16.gmra.mrb[0].mxu0 %v1257
        %v1356 = vpop.f32.mrb[0].mxu0
        %v1357 = vadd.f32 0.0, %v1356
        %v1358 = vpop.f32.mrb[0].mxu0
        %v1359 = vpop.f32.mrb[0].mxu0
        %v1360 = vpop.f32.mrb[0].mxu0
        %1361 = vdwg.mxu0
        %v1362 = vmax.f32 %v1357, 0.0
        %s1363 = scalar_lea.vmem %s263, 6 [#allocation10]
        %1364 = vst [vmem:[%s1363] sm:$0x3] %v1362
        %1365 = vst [vmem:[#allocation2] sm:$0x3] %v1255
        %1366 = vst [vmem:[%s495] sm:$0x3] %v1362
        %p1367 = scmp.eq.s32.totalorder %s29, 1
        // Predicated region
        $region49: #{tpu_custom_call.1} parent=31 // pred_check
          %p1368 = pneg %p1367
        $region50: #{tpu_custom_call.1} parent=31 // pred_check_branch
          %1370 = sbr.rel (%p1368) target = $region52
        $region51: #{tpu_custom_call.1} parent=31 // pred_region
          %v1371 = vld [vmem:[#allocation2] sm:$0x3]
          %v1372 = vld [vmem:[#allocation2 + $0x2] sm:$0x3]
          %1373 = vst [vmem:[#allocation11] sm:$0x3] %v1371
          %1374 = vst [vmem:[#allocation11 + $0x2] sm:$0x3] %v1372
        $region52: #{tpu_custom_call.1} parent=31 // pred_fallthru
          _
        %s1375 = sand.u32 %s116, 1
        %s1376 = scalar_lea.sflag [#allocation6], %s1375
        %s1377 = sand.u32 %s116, 1
        %s1378 = smul.addr %s1377, 8
        %s1379 = scalar_lea.vmem [#allocation10], %s1378
        // Predicated region
        $region53: #{tpu_custom_call.1} parent=31 // pred_check
          %p1380 = pneg %p126
        $region54: #{tpu_custom_call.1} parent=31 // pred_check_branch
          %1382 = sbr.rel (%p1380) target = $region56
        $region55: #{tpu_custom_call.1} parent=31 // pred_region
          %s1383 = smul.u32 4, %s29
          %s1385 = ssub.s32 128, 128
          %1386 = vsyncadd %s1376, %s1385
          %s1387 = sadd.s32 %s28, %s1383
          %s1388 = smul.addr %s1387, 32
          %s1389 = scalar_lea.hbm %s3, %s1388
          %s1390 = sshll.u32 %s1379, 4
          %s1391 = int_to_ptr.vmem [resolvable:$true] %s1390
          %1396 = dma.vmem_to_hbm [thread:$0]  %s1391, 128, %s1389, %s1376, 32, 32, 2
        $region56: #{tpu_custom_call.1} parent=31 // pred_fallthru
          _
        // Predicated region
        $region57: #{tpu_custom_call.1} parent=31 // pred_check
          %p1397 = pneg %p152
        $region58: #{tpu_custom_call.1} parent=31 // pred_check_branch
          %1399 = sbr.rel (%p1397) target = $region60
        $region59: #{tpu_custom_call.1} parent=31 // pred_region
          %s1401 = ssub.s32 64, 64
          %1402 = vsyncadd [#allocation12], %s1401
          %s1403 = smul.addr %s28, 32
          %s1404 = scalar_lea.hbm %s4, %s1403
          %s1405 = sshll.u32 [#allocation11], 4
          %s1406 = int_to_ptr.vmem [resolvable:$true] %s1405
          %1411 = dma.vmem_to_hbm [thread:$0]  %s1406, 64, %s1404, [#allocation12], 32, 32, 2
        $region60: #{tpu_custom_call.1} parent=31 // pred_fallthru
          _
        // Predicated region
        $region61: #{tpu_custom_call.1} parent=31 // pred_check
          %p1412 = pneg %p152
        $region62: #{tpu_custom_call.1} parent=31 // pred_check_branch
          %1414 = sbr.rel (%p1412) target = $region64
        $region63: #{tpu_custom_call.1} parent=31 // pred_region
          %1415 = dma.done [#allocation12], 64
        $region64: #{tpu_custom_call.1} parent=31 // pred_fallthru
          _
      $region32: #{tpu_custom_call.1} parent=5 // pred_fallthru
        _
      %p1416 = scmp.le.s32.totalorder 2, %s19
      // Predicated region
      $region65: #{tpu_custom_call.1} parent=5 // pred_check
        %p1417 = pneg %p1416
      $region66: #{tpu_custom_call.1} parent=5 // pred_check_branch
        %1419 = sbr.rel (%p1417) target = $region68
      $region67: #{tpu_custom_call.1} parent=5 // pred_region
        %s1420 = ssub.s32 %s19, 2
        // Predicated region
        $region69: #{tpu_custom_call.1} parent=67 // pred_check
          %p1421 = pneg %p132
        $region70: #{tpu_custom_call.1} parent=67 // pred_check_branch
          %1423 = sbr.rel (%p1421) target = $region72
        $region71: #{tpu_custom_call.1} parent=67 // pred_region
          %s1424 = sand.u32 %s117, 1
          %s1425 = scalar_lea.sflag [#allocation6], %s1424
          %s1426 = sand.u32 %s117, 1
          %s1427 = smul.addr %s1426, 8
          %s1428 = scalar_lea.vmem [#allocation10], %s1427
          %1429 = dma.done %s1425, 128
        $region72: #{tpu_custom_call.1} parent=67 // pred_fallthru
          _
      $region68: #{tpu_custom_call.1} parent=5 // pred_fallthru
        _
    $region6: #{tpu_custom_call.1} parent=1 // loop_footer
      %s23 = sadd.s32 1, %s19
    $region7: #{tpu_custom_call.1} parent=1 // loop_footer_branch
      %18 = sbr.rel target = $region3
    $region8: #{tpu_custom_call.1} parent=1 // loop_exit
      _
    %1430 = vsyncpa [#allocation5], 1
    %s1431 = scalar_lea.sflag [#allocation5], 1
    %1432 = vsyncpa %s1431, 1
    %1433 = vsyncpa [#allocation8], 1
    %1434 = vsyncpa [#allocation6], 1
    %s1435 = scalar_lea.sflag [#allocation6], 1
    %1436 = vsyncpa %s1435, 1
    %1437 = vsyncpa [#allocation12], 1

</llo_original>
